<compile_context>
chip_gen: v7x
topology: tpu7x:2x2x1
jax: 0.10.0
libtpu: 0.0.40
codegen_flags: <defaults>
</compile_context>

<pallas_src>
import functools
import math

import jax
import jax.numpy as jnp
from jax import lax
from jax.experimental import pallas as pl
from jax.experimental.pallas import tpu as pltpu

LANE = 128        # TPU lane width; all matmul N dims are padded to this.
DEFAULT_TB = 32   # batch-tile per grid step (VMEM use per step is tiny)


def _round_up(x, m):
    return (x + m - 1) // m * m


# ----------------------------------------------------------------------------
# Fused encoder kernel: conv1 -> conv2 -> conv3 -> flatten -> linear (+ReLUs),
# one batch tile per grid step.  c1/c2/c3 are the *real* conv channel counts
# (outputs are 128-lane padded).
# ----------------------------------------------------------------------------
def _encoder_kernel(x_ref, w1_ref, b1_ref, w2_ref, b2_ref, w3_ref, b3_ref,
                    w4_ref, b4_ref, o_ref, *, c1, c2, c3):
    x = x_ref[...]                                    # (TB, Hs, Ws, 16*C) bf16
    w1 = w1_ref[...]; b1 = b1_ref[...]
    w2 = w2_ref[...]; b2 = b2_ref[...]
    w3 = w3_ref[...]; b3 = b3_ref[...]
    w4 = w4_ref[...]; b4 = b4_ref[...]

    tb, hs, ws, cs = x.shape
    h1, w1o = hs - 1, ws - 1                          # conv1 output spatial

    # ---- conv1: 8x8 stride 4 == 2x2 stride 1 on the space-to-depth(4) input.
    cols = [x[:, a:a + h1, e:e + w1o, :] for a in range(2) for e in range(2)]
    patches = jnp.concatenate(cols, axis=-1)          # (TB, h1, w1o, 4*cs)
    patches = patches.reshape(tb * h1 * w1o, 4 * cs)  # tile-aligned flatten
    acc1 = jnp.dot(patches, w1, preferred_element_type=jnp.float32) + b1
    a1 = jnp.maximum(acc1, 0.0).astype(x.dtype)       # (TB*h1*w1o, 128) bf16
    a1 = a1.reshape(tb, h1, w1o, -1)[..., :c1]        # (TB, h1, w1o, 32)

    # ---- conv2: 4x4 stride 2 == 2x2 stride 1 on space-to-depth(2) of a1.
    h2, w2o = h1 // 2 - 1, w1o // 2 - 1               # conv2 output spatial
    def z2(i, j):  # s2d(2) pixel (i, j); lanes ordered ((r*2+t)*c1 + c)
        return jnp.concatenate(
            [a1[:, 2 * i + r, 2 * j + t, :] for r in range(2) for t in range(2)],
            axis=-1)                                   # (TB, 4*c1)
    z2cache = {(i, j): z2(i, j)
               for i in range(h2 + 1) for j in range(w2o + 1)}

    def conv2_pos(ho, wo):
        p = jnp.concatenate([z2cache[(ho + a, wo + e)]
                             for a in range(2) for e in range(2)], axis=-1)
        y = jnp.dot(p, w2, preferred_element_type=jnp.float32) + b2
        return jnp.maximum(y, 0.0)                    # (TB, 128) f32
    y2 = {(i, j): conv2_pos(i, j) for i in range(h2) for j in range(w2o)}

    # ---- conv3: 3x3 stride 1 (position-wise), then flatten + linear.
    h3, w3o = h2 - 2, w2o - 2
    def conv3_pos(ho, wo):
        p = jnp.concatenate([y2[(ho + di, wo + dj)][:, :c2]
                             for di in range(3) for dj in range(3)],
                            axis=-1).astype(x.dtype)   # (TB, 9*c2) bf16
        y = jnp.dot(p, w3, preferred_element_type=jnp.float32) + b3
        return jnp.maximum(y, 0.0)                    # (TB, 128) f32

    y3 = [conv3_pos(i, j)[:, :c3] for i in range(h3) for j in range(w3o)]
    flat = (y3[0] if len(y3) == 1
            else jnp.concatenate(y3, axis=-1)).astype(x.dtype)  # (TB, n_flat)

    out = jnp.dot(flat, w4, preferred_element_type=jnp.float32) + b4
    o_ref[:, 0, :] = jnp.maximum(out, 0.0)


# ----------------------------------------------------------------------------
# Parameter init: mirrors default_layer_init (uniform(-1/sqrt(weight.size(1))))
# in the original PyTorch layouts.
# ----------------------------------------------------------------------------
def init_encoder_params(key, obs_shape, latent_dim):
    C, H, W = obs_shape

    def uinit(k, shape, fan):
        stdv = 1.0 / math.sqrt(fan)
        return jax.random.uniform(k, shape, jnp.float32, -stdv, stdv)

    ks = jax.random.split(key, 8)
    params = {
        "w1": uinit(ks[0], (32, C, 8, 8), C),
        "b1": uinit(ks[1], (32,), C),
        "w2": uinit(ks[2], (64, 32, 4, 4), 32),
        "b2": uinit(ks[3], (64,), 32),
        "w3": uinit(ks[4], (64, 64, 3, 3), 64),
        "b3": uinit(ks[5], (64,), 64),
    }
    h1, w1_ = (H - 8) // 4 + 1, (W - 8) // 4 + 1
    h2, w2_ = (h1 - 4) // 2 + 1, (w1_ - 4) // 2 + 1
    h3, w3_ = h2 - 3 + 1, w2_ - 3 + 1
    n_flatten = 64 * h3 * w3_
    params["w4"] = uinit(ks[6], (latent_dim, n_flatten), n_flatten)
    params["b4"] = uinit(ks[7], (latent_dim,), n_flatten)
    return params


# ----------------------------------------------------------------------------
# One-time conversion of torch-layout params into the fused-kernel layout.
#   conv weight (O, Cin, K, K) with stride s: split di=(a,r), dj=(e,t) with
#   di = a*s + r, reorder rows to (a, e, r, t, c) so they match the kernel's
#   patch lane order, zero-pad O to 128, bf16.  Biases -> (1, 128) f32.
#   Linear weight rows are permuted from NCHW-flatten to the kernel's
#   NHWC-flatten order (bit-identical permutation of torch's Flatten+Linear).
# ----------------------------------------------------------------------------
def prepare_encoder_params(params, obs_shape, latent_dim):
    C, H, W = obs_shape

    def prep_conv(w_pt, b, s):
        O, Cin, K, _ = w_pt.shape
        m = K // s
        O_pad = _round_up(max(O, LANE), LANE)
        w = w_pt.reshape(O, Cin, m, s, m, s)                 # (o,c,a,r,e,t)
        w = jnp.transpose(w, (2, 4, 3, 5, 1, 0))             # (a,e,r,t,c,o)
        w = w.reshape(m * m * s * s * Cin, O)
        w = jnp.pad(w, ((0, 0), (0, O_pad - O))).astype(jnp.bfloat16)
        bb = jnp.pad(b, (0, O_pad - O)).reshape(1, O_pad).astype(jnp.float32)
        return w, bb

    w1, b1 = prep_conv(params["w1"], params["b1"], 4)
    w2, b2 = prep_conv(params["w2"], params["b2"], 2)
    w3, b3 = prep_conv(params["w3"], params["b3"], 1)

    h1, w1_ = (H - 8) // 4 + 1, (W - 8) // 4 + 1
    h2, w2_ = (h1 - 4) // 2 + 1, (w1_ - 4) // 2 + 1
    h3, w3_ = h2 - 2, w2_ - 2
    n_flatten = 64 * h3 * w3_

    w4 = params["w4"].reshape(latent_dim, 64, h3, w3_)
    w4 = jnp.transpose(w4, (2, 3, 1, 0)).reshape(n_flatten, latent_dim)
    lat_pad = _round_up(max(latent_dim, LANE), LANE)
    w4 = jnp.pad(w4, ((0, 0), (0, lat_pad - latent_dim))).astype(jnp.bfloat16)
    b4 = jnp.pad(params["b4"], (0, lat_pad - latent_dim)) \
            .reshape(1, lat_pad).astype(jnp.float32)

    return {"w1": w1, "b1": b1, "w2": w2, "b2": b2, "w3": w3, "b3": b3,
            "w4": w4, "b4": b4}


# ----------------------------------------------------------------------------
# Encoder forward (NCHW in, (N, latent_dim) out), matching the PyTorch module.
# ----------------------------------------------------------------------------
def encoder_forward(prep, obs_nchw, *, latent_dim, tb=DEFAULT_TB):
    N, C, H, W = obs_nchw.shape
    S1 = 4
    assert H % S1 == 0 and W % S1 == 0 and H >= 36 and W >= 36

    # NCHW -> NHWC -> space-to-depth(4): folds conv1's stride into channels so
    # the in-kernel gather only needs unit-stride window slices (no HBM im2col).
    Hs, Ws, Cs = H // S1, W // S1, S1 * S1 * C
    x = jnp.transpose(obs_nchw, (0, 2, 3, 1))
    x = x.reshape(N, Hs, S1, Ws, S1, C).transpose(0, 1, 3, 2, 4, 5)
    x = x.reshape(N, Hs, Ws, Cs).astype(jnp.bfloat16)

    # Batch tiling: >= 2 grid steps whenever N >= 2 (megacore on v7x).
    tb_eff = max(1, min(tb, pl.cdiv(N, 2)))
    grid_n = pl.cdiv(N, tb_eff)
    n_pad = grid_n * tb_eff
    if n_pad != N:
        x = jnp.pad(x, ((0, n_pad - N), (0, 0), (0, 0), (0, 0)))

    lat_pad = prep["w4"].shape[1]
    n_flatten = prep["w4"].shape[0]

    # Cost estimate (per-sample MACs of the four fused matmuls).
    h1, w1_ = Hs - 1, Ws - 1
    h2, w2_ = h1 // 2 - 1, w1_ // 2 - 1
    h3, w3_ = h2 - 2, w2_ - 2
    macs = (h1 * w1_ * (4 * Cs) * LANE + h2 * w2_ * 512 * LANE
            + h3 * w3_ * 576 * LANE + n_flatten * lat_pad)
    bytes_accessed = int(x.size * 2 + n_pad * lat_pad * 4
                         + sum(prep[k].size * 2 for k in ("w1", "w2", "w3", "w4"))
                         + 4 * LANE * 4)

    kernel = functools.partial(_encoder_kernel, c1=32, c2=64, c3=64)

    out = pl.pallas_call(
        kernel,
        out_shape=jax.ShapeDtypeStruct((n_pad, 1, lat_pad), jnp.float32),
        grid_spec=pltpu.PrefetchScalarGridSpec(
            num_scalar_prefetch=0,
            grid=(grid_n,),
            in_specs=[
                pl.BlockSpec((tb_eff, Hs, Ws, Cs), lambda i: (i, 0, 0, 0)),
                pl.BlockSpec(prep["w1"].shape, lambda i: (0, 0)),
                pl.BlockSpec(prep["b1"].shape, lambda i: (0, 0)),
                pl.BlockSpec(prep["w2"].shape, lambda i: (0, 0)),
                pl.BlockSpec(prep["b2"].shape, lambda i: (0, 0)),
                pl.BlockSpec(prep["w3"].shape, lambda i: (0, 0)),
                pl.BlockSpec(prep["b3"].shape, lambda i: (0, 0)),
                pl.BlockSpec(prep["w4"].shape, lambda i: (0, 0)),
                pl.BlockSpec(prep["b4"].shape, lambda i: (0, 0)),
            ],
            out_specs=pl.BlockSpec((tb_eff, 1, lat_pad), lambda i: (i, 0, 0)),
        ),
        compiler_params=pltpu.CompilerParams(
            dimension_semantics=("parallel",),          # megacore on v7x
            vmem_limit_bytes=32 * 1024 * 1024,          # safe on v5e/v6e/v7x
        ),
        cost_estimate=pl.CostEstimate(
            flops=2 * macs * n_pad,
            transcendentals=0,
            bytes_accessed=bytes_accessed),
    )(x, prep["w1"], prep["b1"], prep["w2"], prep["b2"],
      prep["w3"], prep["b3"], prep["w4"], prep["b4"])

    return out[:N, 0, :latent_dim]


# ----------------------------------------------------------------------------
# Pure-JAX f32 reference (torch semantics) for a tolerance check.
# ----------------------------------------------------------------------------
def _reference_forward(params, obs):
    def conv(x, w, b, stride):
        y = lax.conv_general_dilated(
            x, w, window_strides=(stride, stride), padding="VALID",
            dimension_numbers=("NCHW", "OIHW", "NCHW"))
        return jnp.maximum(y + b[None, :, None, None], 0.0)

    x = conv(obs, params["w1"], params["b1"], 4)
    x = conv(x, params["w2"], params["b2"], 2)
    x = conv(x, params["w3"], params["b3"], 1)
    x = x.reshape(x.shape[0], -1)
    return jnp.maximum(x @ params["w4"].T + params["b4"], 0.0)


if __name__ == "__main__":
    # 36x36 input -> conv1: 8x8 -> conv2: 3x3 -> conv3: 1x1 -> n_flatten = 64.
    obs_shape = (4, 36, 36)     # (C, H, W)
    batch = 2
    latent_dim = 32

    key = jax.random.PRNGKey(0)
    k_params, k_obs = jax.random.split(key)
    params = init_encoder_params(k_params, obs_shape, latent_dim)
    prep = prepare_encoder_params(params, obs_shape, latent_dim)
    obs = jax.random.normal(k_obs, (batch,) + obs_shape, dtype=jnp.float32)

    fwd = jax.jit(functools.partial(encoder_forward, latent_dim=latent_dim))
    out = jax.block_until_ready(fwd(prep, obs))

    assert out.shape == (batch, latent_dim), out.shape
    assert out.dtype == jnp.float32
    assert bool(jnp.all(out >= 0.0))            # final ReLU

    ref = _reference_forward(params, obs)       # f32 reference
    max_diff = float(jnp.max(jnp.abs(out - ref)))
    assert bool(jnp.allclose(out, ref, atol=0.5, rtol=0.05)), max_diff

    print("KERNEL_OK")
</pallas_src>

<mosaic_0001>
module attributes {stable_mosaic.version = 11 : i64} {
  func.func @_encoder_kernel(%arg0: i32, %arg1: memref<1x9x9x64xbf16, #tpu.memory_space<vmem>>, %arg2: memref<256x128xbf16, #tpu.memory_space<vmem>>, %arg3: memref<1x128xf32, #tpu.memory_space<vmem>>, %arg4: memref<512x128xbf16, #tpu.memory_space<vmem>>, %arg5: memref<1x128xf32, #tpu.memory_space<vmem>>, %arg6: memref<576x128xbf16, #tpu.memory_space<vmem>>, %arg7: memref<1x128xf32, #tpu.memory_space<vmem>>, %arg8: memref<64x128xbf16, #tpu.memory_space<vmem>>, %arg9: memref<1x128xf32, #tpu.memory_space<vmem>>, %arg10: memref<1x1x128xf32, #tpu.memory_space<vmem>>) attributes {dimension_semantics = [#tpu.dimension_semantics<parallel>], iteration_bounds = array<i64: 2>, scalar_prefetch = 0 : i64, scratch_operands = 0 : i64, tpu.core_type = #tpu.core_type<tc>, window_params = [{transform_indices = @transform_0, window_bounds = array<i64: 1, 9, 9, 64>}, {pipeline_mode = #tpu.pipeline_mode<synchronous>, transform_indices = @transform_1, window_bounds = array<i64: 256, 128>}, {pipeline_mode = #tpu.pipeline_mode<synchronous>, transform_indices = @transform_2, window_bounds = array<i64: 1, 128>}, {pipeline_mode = #tpu.pipeline_mode<synchronous>, transform_indices = @transform_3, window_bounds = array<i64: 512, 128>}, {pipeline_mode = #tpu.pipeline_mode<synchronous>, transform_indices = @transform_4, window_bounds = array<i64: 1, 128>}, {pipeline_mode = #tpu.pipeline_mode<synchronous>, transform_indices = @transform_5, window_bounds = array<i64: 576, 128>}, {pipeline_mode = #tpu.pipeline_mode<synchronous>, transform_indices = @transform_6, window_bounds = array<i64: 1, 128>}, {pipeline_mode = #tpu.pipeline_mode<synchronous>, transform_indices = @transform_7, window_bounds = array<i64: 64, 128>}, {pipeline_mode = #tpu.pipeline_mode<synchronous>, transform_indices = @transform_8, window_bounds = array<i64: 1, 128>}, {transform_indices = @transform_9, window_bounds = array<i64: 1, 1, 128>}]} {
    %c0 = arith.constant 0 : index
    %c0_0 = arith.constant 0 : index
    %c0_1 = arith.constant 0 : index
    %c0_2 = arith.constant 0 : index
    %0 = vector.load %arg1[%c0, %c0_0, %c0_1, %c0_2] : memref<1x9x9x64xbf16, #tpu.memory_space<vmem>>, vector<1x9x9x64xbf16>
    %c0_3 = arith.constant 0 : index
    %c0_4 = arith.constant 0 : index
    %1 = vector.load %arg2[%c0_3, %c0_4] : memref<256x128xbf16, #tpu.memory_space<vmem>>, vector<256x128xbf16>
    %c0_5 = arith.constant 0 : index
    %c0_6 = arith.constant 0 : index
    %2 = vector.load %arg3[%c0_5, %c0_6] : memref<1x128xf32, #tpu.memory_space<vmem>>, vector<1x128xf32>
    %c0_7 = arith.constant 0 : index
    %c0_8 = arith.constant 0 : index
    %3 = vector.load %arg4[%c0_7, %c0_8] : memref<512x128xbf16, #tpu.memory_space<vmem>>, vector<512x128xbf16>
    %c0_9 = arith.constant 0 : index
    %c0_10 = arith.constant 0 : index
    %4 = vector.load %arg5[%c0_9, %c0_10] : memref<1x128xf32, #tpu.memory_space<vmem>>, vector<1x128xf32>
    %c0_11 = arith.constant 0 : index
    %c0_12 = arith.constant 0 : index
    %5 = vector.load %arg6[%c0_11, %c0_12] : memref<576x128xbf16, #tpu.memory_space<vmem>>, vector<576x128xbf16>
    %c0_13 = arith.constant 0 : index
    %c0_14 = arith.constant 0 : index
    %6 = vector.load %arg7[%c0_13, %c0_14] : memref<1x128xf32, #tpu.memory_space<vmem>>, vector<1x128xf32>
    %c0_15 = arith.constant 0 : index
    %c0_16 = arith.constant 0 : index
    %7 = vector.load %arg8[%c0_15, %c0_16] : memref<64x128xbf16, #tpu.memory_space<vmem>>, vector<64x128xbf16>
    %c0_17 = arith.constant 0 : index
    %c0_18 = arith.constant 0 : index
    %8 = vector.load %arg9[%c0_17, %c0_18] : memref<1x128xf32, #tpu.memory_space<vmem>>, vector<1x128xf32>
    %9 = vector.extract_strided_slice %0 {offsets = [0, 0, 0, 0], sizes = [1, 8, 8, 64], strides = [1, 1, 1, 1]} : vector<1x9x9x64xbf16> to vector<1x8x8x64xbf16>
    %10 = vector.extract_strided_slice %0 {offsets = [0, 0, 1, 0], sizes = [1, 8, 8, 64], strides = [1, 1, 1, 1]} : vector<1x9x9x64xbf16> to vector<1x8x8x64xbf16>
    %11 = vector.extract_strided_slice %0 {offsets = [0, 1, 0, 0], sizes = [1, 8, 8, 64], strides = [1, 1, 1, 1]} : vector<1x9x9x64xbf16> to vector<1x8x8x64xbf16>
    %12 = vector.extract_strided_slice %0 {offsets = [0, 1, 1, 0], sizes = [1, 8, 8, 64], strides = [1, 1, 1, 1]} : vector<1x9x9x64xbf16> to vector<1x8x8x64xbf16>
    %13 = tpu.concatenate %9, %10, %11, %12 in 3 : vector<1x8x8x64xbf16>, vector<1x8x8x64xbf16>, vector<1x8x8x64xbf16>, vector<1x8x8x64xbf16> -> vector<1x8x8x256xbf16>
    %14 = vector.shape_cast %13 : vector<1x8x8x256xbf16> to vector<64x256xbf16>
    %cst = arith.constant dense<0.000000e+00> : vector<64x128xf32>
    %15 = tpu.matmul %14, %1, %cst {dimension_numbers = #tpu.dot_dimension_numbers<[1], [0], [0], [1], [0, 0, 1, 1], [], []>} : vector<64x256xbf16>, vector<256x128xbf16>, vector<64x128xf32> -> vector<64x128xf32>
    %16 = vector.broadcast %2 : vector<1x128xf32> to vector<64x128xf32>
    %17 = arith.addf %15, %16 : vector<64x128xf32>
    %cst_19 = arith.constant 0.000000e+00 : f32
    %18 = vector.broadcast %cst_19 : f32 to vector<64x128xf32>
    %19 = arith.maximumf %17, %18 : vector<64x128xf32>
    %20 = arith.truncf %19 : vector<64x128xf32> to vector<64x128xbf16>
    %21 = vector.shape_cast %20 : vector<64x128xbf16> to vector<1x8x8x128xbf16>
    %22 = vector.extract_strided_slice %21 {offsets = [0, 0, 0, 0], sizes = [1, 8, 8, 32], strides = [1, 1, 1, 1]} : vector<1x8x8x128xbf16> to vector<1x8x8x32xbf16>
    %23 = vector.extract_strided_slice %22 {offsets = [0, 0, 0, 0], sizes = [1, 1, 1, 32], strides = [1, 1, 1, 1]} : vector<1x8x8x32xbf16> to vector<1x1x1x32xbf16>
    %24 = vector.shape_cast %23 : vector<1x1x1x32xbf16> to vector<1x32xbf16>
    %25 = vector.extract_strided_slice %22 {offsets = [0, 0, 1, 0], sizes = [1, 1, 1, 32], strides = [1, 1, 1, 1]} : vector<1x8x8x32xbf16> to vector<1x1x1x32xbf16>
    %26 = vector.shape_cast %25 : vector<1x1x1x32xbf16> to vector<1x32xbf16>
    %27 = vector.extract_strided_slice %22 {offsets = [0, 1, 0, 0], sizes = [1, 1, 1, 32], strides = [1, 1, 1, 1]} : vector<1x8x8x32xbf16> to vector<1x1x1x32xbf16>
    %28 = vector.shape_cast %27 : vector<1x1x1x32xbf16> to vector<1x32xbf16>
    %29 = vector.extract_strided_slice %22 {offsets = [0, 1, 1, 0], sizes = [1, 1, 1, 32], strides = [1, 1, 1, 1]} : vector<1x8x8x32xbf16> to vector<1x1x1x32xbf16>
    %30 = vector.shape_cast %29 : vector<1x1x1x32xbf16> to vector<1x32xbf16>
    %31 = tpu.concatenate %24, %26, %28, %30 in 1 : vector<1x32xbf16>, vector<1x32xbf16>, vector<1x32xbf16>, vector<1x32xbf16> -> vector<1x128xbf16>
    %32 = vector.extract_strided_slice %22 {offsets = [0, 0, 2, 0], sizes = [1, 1, 1, 32], strides = [1, 1, 1, 1]} : vector<1x8x8x32xbf16> to vector<1x1x1x32xbf16>
    %33 = vector.shape_cast %32 : vector<1x1x1x32xbf16> to vector<1x32xbf16>
    %34 = vector.extract_strided_slice %22 {offsets = [0, 0, 3, 0], sizes = [1, 1, 1, 32], strides = [1, 1, 1, 1]} : vector<1x8x8x32xbf16> to vector<1x1x1x32xbf16>
    %35 = vector.shape_cast %34 : vector<1x1x1x32xbf16> to vector<1x32xbf16>
    %36 = vector.extract_strided_slice %22 {offsets = [0, 1, 2, 0], sizes = [1, 1, 1, 32], strides = [1, 1, 1, 1]} : vector<1x8x8x32xbf16> to vector<1x1x1x32xbf16>
    %37 = vector.shape_cast %36 : vector<1x1x1x32xbf16> to vector<1x32xbf16>
    %38 = vector.extract_strided_slice %22 {offsets = [0, 1, 3, 0], sizes = [1, 1, 1, 32], strides = [1, 1, 1, 1]} : vector<1x8x8x32xbf16> to vector<1x1x1x32xbf16>
    %39 = vector.shape_cast %38 : vector<1x1x1x32xbf16> to vector<1x32xbf16>
    %40 = tpu.concatenate %33, %35, %37, %39 in 1 : vector<1x32xbf16>, vector<1x32xbf16>, vector<1x32xbf16>, vector<1x32xbf16> -> vector<1x128xbf16>
    %41 = vector.extract_strided_slice %22 {offsets = [0, 0, 4, 0], sizes = [1, 1, 1, 32], strides = [1, 1, 1, 1]} : vector<1x8x8x32xbf16> to vector<1x1x1x32xbf16>
    %42 = vector.shape_cast %41 : vector<1x1x1x32xbf16> to vector<1x32xbf16>
    %43 = vector.extract_strided_slice %22 {offsets = [0, 0, 5, 0], sizes = [1, 1, 1, 32], strides = [1, 1, 1, 1]} : vector<1x8x8x32xbf16> to vector<1x1x1x32xbf16>
    %44 = vector.shape_cast %43 : vector<1x1x1x32xbf16> to vector<1x32xbf16>
    %45 = vector.extract_strided_slice %22 {offsets = [0, 1, 4, 0], sizes = [1, 1, 1, 32], strides = [1, 1, 1, 1]} : vector<1x8x8x32xbf16> to vector<1x1x1x32xbf16>
    %46 = vector.shape_cast %45 : vector<1x1x1x32xbf16> to vector<1x32xbf16>
    %47 = vector.extract_strided_slice %22 {offsets = [0, 1, 5, 0], sizes = [1, 1, 1, 32], strides = [1, 1, 1, 1]} : vector<1x8x8x32xbf16> to vector<1x1x1x32xbf16>
    %48 = vector.shape_cast %47 : vector<1x1x1x32xbf16> to vector<1x32xbf16>
    %49 = tpu.concatenate %42, %44, %46, %48 in 1 : vector<1x32xbf16>, vector<1x32xbf16>, vector<1x32xbf16>, vector<1x32xbf16> -> vector<1x128xbf16>
    %50 = vector.extract_strided_slice %22 {offsets = [0, 0, 6, 0], sizes = [1, 1, 1, 32], strides = [1, 1, 1, 1]} : vector<1x8x8x32xbf16> to vector<1x1x1x32xbf16>
    %51 = vector.shape_cast %50 : vector<1x1x1x32xbf16> to vector<1x32xbf16>
    %52 = vector.extract_strided_slice %22 {offsets = [0, 0, 7, 0], sizes = [1, 1, 1, 32], strides = [1, 1, 1, 1]} : vector<1x8x8x32xbf16> to vector<1x1x1x32xbf16>
    %53 = vector.shape_cast %52 : vector<1x1x1x32xbf16> to vector<1x32xbf16>
    %54 = vector.extract_strided_slice %22 {offsets = [0, 1, 6, 0], sizes = [1, 1, 1, 32], strides = [1, 1, 1, 1]} : vector<1x8x8x32xbf16> to vector<1x1x1x32xbf16>
    %55 = vector.shape_cast %54 : vector<1x1x1x32xbf16> to vector<1x32xbf16>
    %56 = vector.extract_strided_slice %22 {offsets = [0, 1, 7, 0], sizes = [1, 1, 1, 32], strides = [1, 1, 1, 1]} : vector<1x8x8x32xbf16> to vector<1x1x1x32xbf16>
    %57 = vector.shape_cast %56 : vector<1x1x1x32xbf16> to vector<1x32xbf16>
    %58 = tpu.concatenate %51, %53, %55, %57 in 1 : vector<1x32xbf16>, vector<1x32xbf16>, vector<1x32xbf16>, vector<1x32xbf16> -> vector<1x128xbf16>
    %59 = vector.extract_strided_slice %22 {offsets = [0, 2, 0, 0], sizes = [1, 1, 1, 32], strides = [1, 1, 1, 1]} : vector<1x8x8x32xbf16> to vector<1x1x1x32xbf16>
    %60 = vector.shape_cast %59 : vector<1x1x1x32xbf16> to vector<1x32xbf16>
    %61 = vector.extract_strided_slice %22 {offsets = [0, 2, 1, 0], sizes = [1, 1, 1, 32], strides = [1, 1, 1, 1]} : vector<1x8x8x32xbf16> to vector<1x1x1x32xbf16>
    %62 = vector.shape_cast %61 : vector<1x1x1x32xbf16> to vector<1x32xbf16>
    %63 = vector.extract_strided_slice %22 {offsets = [0, 3, 0, 0], sizes = [1, 1, 1, 32], strides = [1, 1, 1, 1]} : vector<1x8x8x32xbf16> to vector<1x1x1x32xbf16>
    %64 = vector.shape_cast %63 : vector<1x1x1x32xbf16> to vector<1x32xbf16>
    %65 = vector.extract_strided_slice %22 {offsets = [0, 3, 1, 0], sizes = [1, 1, 1, 32], strides = [1, 1, 1, 1]} : vector<1x8x8x32xbf16> to vector<1x1x1x32xbf16>
    %66 = vector.shape_cast %65 : vector<1x1x1x32xbf16> to vector<1x32xbf16>
    %67 = tpu.concatenate %60, %62, %64, %66 in 1 : vector<1x32xbf16>, vector<1x32xbf16>, vector<1x32xbf16>, vector<1x32xbf16> -> vector<1x128xbf16>
    %68 = vector.extract_strided_slice %22 {offsets = [0, 2, 2, 0], sizes = [1, 1, 1, 32], strides = [1, 1, 1, 1]} : vector<1x8x8x32xbf16> to vector<1x1x1x32xbf16>
    %69 = vector.shape_cast %68 : vector<1x1x1x32xbf16> to vector<1x32xbf16>
    %70 = vector.extract_strided_slice %22 {offsets = [0, 2, 3, 0], sizes = [1, 1, 1, 32], strides = [1, 1, 1, 1]} : vector<1x8x8x32xbf16> to vector<1x1x1x32xbf16>
    %71 = vector.shape_cast %70 : vector<1x1x1x32xbf16> to vector<1x32xbf16>
    %72 = vector.extract_strided_slice %22 {offsets = [0, 3, 2, 0], sizes = [1, 1, 1, 32], strides = [1, 1, 1, 1]} : vector<1x8x8x32xbf16> to vector<1x1x1x32xbf16>
    %73 = vector.shape_cast %72 : vector<1x1x1x32xbf16> to vector<1x32xbf16>
    %74 = vector.extract_strided_slice %22 {offsets = [0, 3, 3, 0], sizes = [1, 1, 1, 32], strides = [1, 1, 1, 1]} : vector<1x8x8x32xbf16> to vector<1x1x1x32xbf16>
    %75 = vector.shape_cast %74 : vector<1x1x1x32xbf16> to vector<1x32xbf16>
    %76 = tpu.concatenate %69, %71, %73, %75 in 1 : vector<1x32xbf16>, vector<1x32xbf16>, vector<1x32xbf16>, vector<1x32xbf16> -> vector<1x128xbf16>
    %77 = vector.extract_strided_slice %22 {offsets = [0, 2, 4, 0], sizes = [1, 1, 1, 32], strides = [1, 1, 1, 1]} : vector<1x8x8x32xbf16> to vector<1x1x1x32xbf16>
    %78 = vector.shape_cast %77 : vector<1x1x1x32xbf16> to vector<1x32xbf16>
    %79 = vector.extract_strided_slice %22 {offsets = [0, 2, 5, 0], sizes = [1, 1, 1, 32], strides = [1, 1, 1, 1]} : vector<1x8x8x32xbf16> to vector<1x1x1x32xbf16>
    %80 = vector.shape_cast %79 : vector<1x1x1x32xbf16> to vector<1x32xbf16>
    %81 = vector.extract_strided_slice %22 {offsets = [0, 3, 4, 0], sizes = [1, 1, 1, 32], strides = [1, 1, 1, 1]} : vector<1x8x8x32xbf16> to vector<1x1x1x32xbf16>
    %82 = vector.shape_cast %81 : vector<1x1x1x32xbf16> to vector<1x32xbf16>
    %83 = vector.extract_strided_slice %22 {offsets = [0, 3, 5, 0], sizes = [1, 1, 1, 32], strides = [1, 1, 1, 1]} : vector<1x8x8x32xbf16> to vector<1x1x1x32xbf16>
    %84 = vector.shape_cast %83 : vector<1x1x1x32xbf16> to vector<1x32xbf16>
    %85 = tpu.concatenate %78, %80, %82, %84 in 1 : vector<1x32xbf16>, vector<1x32xbf16>, vector<1x32xbf16>, vector<1x32xbf16> -> vector<1x128xbf16>
    %86 = vector.extract_strided_slice %22 {offsets = [0, 2, 6, 0], sizes = [1, 1, 1, 32], strides = [1, 1, 1, 1]} : vector<1x8x8x32xbf16> to vector<1x1x1x32xbf16>
    %87 = vector.shape_cast %86 : vector<1x1x1x32xbf16> to vector<1x32xbf16>
    %88 = vector.extract_strided_slice %22 {offsets = [0, 2, 7, 0], sizes = [1, 1, 1, 32], strides = [1, 1, 1, 1]} : vector<1x8x8x32xbf16> to vector<1x1x1x32xbf16>
    %89 = vector.shape_cast %88 : vector<1x1x1x32xbf16> to vector<1x32xbf16>
    %90 = vector.extract_strided_slice %22 {offsets = [0, 3, 6, 0], sizes = [1, 1, 1, 32], strides = [1, 1, 1, 1]} : vector<1x8x8x32xbf16> to vector<1x1x1x32xbf16>
    %91 = vector.shape_cast %90 : vector<1x1x1x32xbf16> to vector<1x32xbf16>
    %92 = vector.extract_strided_slice %22 {offsets = [0, 3, 7, 0], sizes = [1, 1, 1, 32], strides = [1, 1, 1, 1]} : vector<1x8x8x32xbf16> to vector<1x1x1x32xbf16>
    %93 = vector.shape_cast %92 : vector<1x1x1x32xbf16> to vector<1x32xbf16>
    %94 = tpu.concatenate %87, %89, %91, %93 in 1 : vector<1x32xbf16>, vector<1x32xbf16>, vector<1x32xbf16>, vector<1x32xbf16> -> vector<1x128xbf16>
    %95 = vector.extract_strided_slice %22 {offsets = [0, 4, 0, 0], sizes = [1, 1, 1, 32], strides = [1, 1, 1, 1]} : vector<1x8x8x32xbf16> to vector<1x1x1x32xbf16>
    %96 = vector.shape_cast %95 : vector<1x1x1x32xbf16> to vector<1x32xbf16>
    %97 = vector.extract_strided_slice %22 {offsets = [0, 4, 1, 0], sizes = [1, 1, 1, 32], strides = [1, 1, 1, 1]} : vector<1x8x8x32xbf16> to vector<1x1x1x32xbf16>
    %98 = vector.shape_cast %97 : vector<1x1x1x32xbf16> to vector<1x32xbf16>
    %99 = vector.extract_strided_slice %22 {offsets = [0, 5, 0, 0], sizes = [1, 1, 1, 32], strides = [1, 1, 1, 1]} : vector<1x8x8x32xbf16> to vector<1x1x1x32xbf16>
    %100 = vector.shape_cast %99 : vector<1x1x1x32xbf16> to vector<1x32xbf16>
    %101 = vector.extract_strided_slice %22 {offsets = [0, 5, 1, 0], sizes = [1, 1, 1, 32], strides = [1, 1, 1, 1]} : vector<1x8x8x32xbf16> to vector<1x1x1x32xbf16>
    %102 = vector.shape_cast %101 : vector<1x1x1x32xbf16> to vector<1x32xbf16>
    %103 = tpu.concatenate %96, %98, %100, %102 in 1 : vector<1x32xbf16>, vector<1x32xbf16>, vector<1x32xbf16>, vector<1x32xbf16> -> vector<1x128xbf16>
    %104 = vector.extract_strided_slice %22 {offsets = [0, 4, 2, 0], sizes = [1, 1, 1, 32], strides = [1, 1, 1, 1]} : vector<1x8x8x32xbf16> to vector<1x1x1x32xbf16>
    %105 = vector.shape_cast %104 : vector<1x1x1x32xbf16> to vector<1x32xbf16>
    %106 = vector.extract_strided_slice %22 {offsets = [0, 4, 3, 0], sizes = [1, 1, 1, 32], strides = [1, 1, 1, 1]} : vector<1x8x8x32xbf16> to vector<1x1x1x32xbf16>
    %107 = vector.shape_cast %106 : vector<1x1x1x32xbf16> to vector<1x32xbf16>
    %108 = vector.extract_strided_slice %22 {offsets = [0, 5, 2, 0], sizes = [1, 1, 1, 32], strides = [1, 1, 1, 1]} : vector<1x8x8x32xbf16> to vector<1x1x1x32xbf16>
    %109 = vector.shape_cast %108 : vector<1x1x1x32xbf16> to vector<1x32xbf16>
    %110 = vector.extract_strided_slice %22 {offsets = [0, 5, 3, 0], sizes = [1, 1, 1, 32], strides = [1, 1, 1, 1]} : vector<1x8x8x32xbf16> to vector<1x1x1x32xbf16>
    %111 = vector.shape_cast %110 : vector<1x1x1x32xbf16> to vector<1x32xbf16>
    %112 = tpu.concatenate %105, %107, %109, %111 in 1 : vector<1x32xbf16>, vector<1x32xbf16>, vector<1x32xbf16>, vector<1x32xbf16> -> vector<1x128xbf16>
    %113 = vector.extract_strided_slice %22 {offsets = [0, 4, 4, 0], sizes = [1, 1, 1, 32], strides = [1, 1, 1, 1]} : vector<1x8x8x32xbf16> to vector<1x1x1x32xbf16>
    %114 = vector.shape_cast %113 : vector<1x1x1x32xbf16> to vector<1x32xbf16>
    %115 = vector.extract_strided_slice %22 {offsets = [0, 4, 5, 0], sizes = [1, 1, 1, 32], strides = [1, 1, 1, 1]} : vector<1x8x8x32xbf16> to vector<1x1x1x32xbf16>
    %116 = vector.shape_cast %115 : vector<1x1x1x32xbf16> to vector<1x32xbf16>
    %117 = vector.extract_strided_slice %22 {offsets = [0, 5, 4, 0], sizes = [1, 1, 1, 32], strides = [1, 1, 1, 1]} : vector<1x8x8x32xbf16> to vector<1x1x1x32xbf16>
    %118 = vector.shape_cast %117 : vector<1x1x1x32xbf16> to vector<1x32xbf16>
    %119 = vector.extract_strided_slice %22 {offsets = [0, 5, 5, 0], sizes = [1, 1, 1, 32], strides = [1, 1, 1, 1]} : vector<1x8x8x32xbf16> to vector<1x1x1x32xbf16>
    %120 = vector.shape_cast %119 : vector<1x1x1x32xbf16> to vector<1x32xbf16>
    %121 = tpu.concatenate %114, %116, %118, %120 in 1 : vector<1x32xbf16>, vector<1x32xbf16>, vector<1x32xbf16>, vector<1x32xbf16> -> vector<1x128xbf16>
    %122 = vector.extract_strided_slice %22 {offsets = [0, 4, 6, 0], sizes = [1, 1, 1, 32], strides = [1, 1, 1, 1]} : vector<1x8x8x32xbf16> to vector<1x1x1x32xbf16>
    %123 = vector.shape_cast %122 : vector<1x1x1x32xbf16> to vector<1x32xbf16>
    %124 = vector.extract_strided_slice %22 {offsets = [0, 4, 7, 0], sizes = [1, 1, 1, 32], strides = [1, 1, 1, 1]} : vector<1x8x8x32xbf16> to vector<1x1x1x32xbf16>
    %125 = vector.shape_cast %124 : vector<1x1x1x32xbf16> to vector<1x32xbf16>
    %126 = vector.extract_strided_slice %22 {offsets = [0, 5, 6, 0], sizes = [1, 1, 1, 32], strides = [1, 1, 1, 1]} : vector<1x8x8x32xbf16> to vector<1x1x1x32xbf16>
    %127 = vector.shape_cast %126 : vector<1x1x1x32xbf16> to vector<1x32xbf16>
    %128 = vector.extract_strided_slice %22 {offsets = [0, 5, 7, 0], sizes = [1, 1, 1, 32], strides = [1, 1, 1, 1]} : vector<1x8x8x32xbf16> to vector<1x1x1x32xbf16>
    %129 = vector.shape_cast %128 : vector<1x1x1x32xbf16> to vector<1x32xbf16>
    %130 = tpu.concatenate %123, %125, %127, %129 in 1 : vector<1x32xbf16>, vector<1x32xbf16>, vector<1x32xbf16>, vector<1x32xbf16> -> vector<1x128xbf16>
    %131 = vector.extract_strided_slice %22 {offsets = [0, 6, 0, 0], sizes = [1, 1, 1, 32], strides = [1, 1, 1, 1]} : vector<1x8x8x32xbf16> to vector<1x1x1x32xbf16>
    %132 = vector.shape_cast %131 : vector<1x1x1x32xbf16> to vector<1x32xbf16>
    %133 = vector.extract_strided_slice %22 {offsets = [0, 6, 1, 0], sizes = [1, 1, 1, 32], strides = [1, 1, 1, 1]} : vector<1x8x8x32xbf16> to vector<1x1x1x32xbf16>
    %134 = vector.shape_cast %133 : vector<1x1x1x32xbf16> to vector<1x32xbf16>
    %135 = vector.extract_strided_slice %22 {offsets = [0, 7, 0, 0], sizes = [1, 1, 1, 32], strides = [1, 1, 1, 1]} : vector<1x8x8x32xbf16> to vector<1x1x1x32xbf16>
    %136 = vector.shape_cast %135 : vector<1x1x1x32xbf16> to vector<1x32xbf16>
    %137 = vector.extract_strided_slice %22 {offsets = [0, 7, 1, 0], sizes = [1, 1, 1, 32], strides = [1, 1, 1, 1]} : vector<1x8x8x32xbf16> to vector<1x1x1x32xbf16>
    %138 = vector.shape_cast %137 : vector<1x1x1x32xbf16> to vector<1x32xbf16>
    %139 = tpu.concatenate %132, %134, %136, %138 in 1 : vector<1x32xbf16>, vector<1x32xbf16>, vector<1x32xbf16>, vector<1x32xbf16> -> vector<1x128xbf16>
    %140 = vector.extract_strided_slice %22 {offsets = [0, 6, 2, 0], sizes = [1, 1, 1, 32], strides = [1, 1, 1, 1]} : vector<1x8x8x32xbf16> to vector<1x1x1x32xbf16>
    %141 = vector.shape_cast %140 : vector<1x1x1x32xbf16> to vector<1x32xbf16>
    %142 = vector.extract_strided_slice %22 {offsets = [0, 6, 3, 0], sizes = [1, 1, 1, 32], strides = [1, 1, 1, 1]} : vector<1x8x8x32xbf16> to vector<1x1x1x32xbf16>
    %143 = vector.shape_cast %142 : vector<1x1x1x32xbf16> to vector<1x32xbf16>
    %144 = vector.extract_strided_slice %22 {offsets = [0, 7, 2, 0], sizes = [1, 1, 1, 32], strides = [1, 1, 1, 1]} : vector<1x8x8x32xbf16> to vector<1x1x1x32xbf16>
    %145 = vector.shape_cast %144 : vector<1x1x1x32xbf16> to vector<1x32xbf16>
    %146 = vector.extract_strided_slice %22 {offsets = [0, 7, 3, 0], sizes = [1, 1, 1, 32], strides = [1, 1, 1, 1]} : vector<1x8x8x32xbf16> to vector<1x1x1x32xbf16>
    %147 = vector.shape_cast %146 : vector<1x1x1x32xbf16> to vector<1x32xbf16>
    %148 = tpu.concatenate %141, %143, %145, %147 in 1 : vector<1x32xbf16>, vector<1x32xbf16>, vector<1x32xbf16>, vector<1x32xbf16> -> vector<1x128xbf16>
    %149 = vector.extract_strided_slice %22 {offsets = [0, 6, 4, 0], sizes = [1, 1, 1, 32], strides = [1, 1, 1, 1]} : vector<1x8x8x32xbf16> to vector<1x1x1x32xbf16>
    %150 = vector.shape_cast %149 : vector<1x1x1x32xbf16> to vector<1x32xbf16>
    %151 = vector.extract_strided_slice %22 {offsets = [0, 6, 5, 0], sizes = [1, 1, 1, 32], strides = [1, 1, 1, 1]} : vector<1x8x8x32xbf16> to vector<1x1x1x32xbf16>
    %152 = vector.shape_cast %151 : vector<1x1x1x32xbf16> to vector<1x32xbf16>
    %153 = vector.extract_strided_slice %22 {offsets = [0, 7, 4, 0], sizes = [1, 1, 1, 32], strides = [1, 1, 1, 1]} : vector<1x8x8x32xbf16> to vector<1x1x1x32xbf16>
    %154 = vector.shape_cast %153 : vector<1x1x1x32xbf16> to vector<1x32xbf16>
    %155 = vector.extract_strided_slice %22 {offsets = [0, 7, 5, 0], sizes = [1, 1, 1, 32], strides = [1, 1, 1, 1]} : vector<1x8x8x32xbf16> to vector<1x1x1x32xbf16>
    %156 = vector.shape_cast %155 : vector<1x1x1x32xbf16> to vector<1x32xbf16>
    %157 = tpu.concatenate %150, %152, %154, %156 in 1 : vector<1x32xbf16>, vector<1x32xbf16>, vector<1x32xbf16>, vector<1x32xbf16> -> vector<1x128xbf16>
    %158 = vector.extract_strided_slice %22 {offsets = [0, 6, 6, 0], sizes = [1, 1, 1, 32], strides = [1, 1, 1, 1]} : vector<1x8x8x32xbf16> to vector<1x1x1x32xbf16>
    %159 = vector.shape_cast %158 : vector<1x1x1x32xbf16> to vector<1x32xbf16>
    %160 = vector.extract_strided_slice %22 {offsets = [0, 6, 7, 0], sizes = [1, 1, 1, 32], strides = [1, 1, 1, 1]} : vector<1x8x8x32xbf16> to vector<1x1x1x32xbf16>
    %161 = vector.shape_cast %160 : vector<1x1x1x32xbf16> to vector<1x32xbf16>
    %162 = vector.extract_strided_slice %22 {offsets = [0, 7, 6, 0], sizes = [1, 1, 1, 32], strides = [1, 1, 1, 1]} : vector<1x8x8x32xbf16> to vector<1x1x1x32xbf16>
    %163 = vector.shape_cast %162 : vector<1x1x1x32xbf16> to vector<1x32xbf16>
    %164 = vector.extract_strided_slice %22 {offsets = [0, 7, 7, 0], sizes = [1, 1, 1, 32], strides = [1, 1, 1, 1]} : vector<1x8x8x32xbf16> to vector<1x1x1x32xbf16>
    %165 = vector.shape_cast %164 : vector<1x1x1x32xbf16> to vector<1x32xbf16>
    %166 = tpu.concatenate %159, %161, %163, %165 in 1 : vector<1x32xbf16>, vector<1x32xbf16>, vector<1x32xbf16>, vector<1x32xbf16> -> vector<1x128xbf16>
    %167 = tpu.concatenate %31, %40, %67, %76 in 1 : vector<1x128xbf16>, vector<1x128xbf16>, vector<1x128xbf16>, vector<1x128xbf16> -> vector<1x512xbf16>
    %cst_20 = arith.constant dense<0.000000e+00> : vector<1x128xf32>
    %168 = tpu.matmul %167, %3, %cst_20 {dimension_numbers = #tpu.dot_dimension_numbers<[1], [0], [0], [1], [0, 0, 1, 1], [], []>} : vector<1x512xbf16>, vector<512x128xbf16>, vector<1x128xf32> -> vector<1x128xf32>
    %169 = arith.addf %168, %4 : vector<1x128xf32>
    %cst_21 = arith.constant 0.000000e+00 : f32
    %170 = vector.broadcast %cst_21 : f32 to vector<1x128xf32>
    %171 = arith.maximumf %169, %170 : vector<1x128xf32>
    %172 = tpu.concatenate %40, %49, %76, %85 in 1 : vector<1x128xbf16>, vector<1x128xbf16>, vector<1x128xbf16>, vector<1x128xbf16> -> vector<1x512xbf16>
    %cst_22 = arith.constant dense<0.000000e+00> : vector<1x128xf32>
    %173 = tpu.matmul %172, %3, %cst_22 {dimension_numbers = #tpu.dot_dimension_numbers<[1], [0], [0], [1], [0, 0, 1, 1], [], []>} : vector<1x512xbf16>, vector<512x128xbf16>, vector<1x128xf32> -> vector<1x128xf32>
    %174 = arith.addf %173, %4 : vector<1x128xf32>
    %cst_23 = arith.constant 0.000000e+00 : f32
    %175 = vector.broadcast %cst_23 : f32 to vector<1x128xf32>
    %176 = arith.maximumf %174, %175 : vector<1x128xf32>
    %177 = tpu.concatenate %49, %58, %85, %94 in 1 : vector<1x128xbf16>, vector<1x128xbf16>, vector<1x128xbf16>, vector<1x128xbf16> -> vector<1x512xbf16>
    %cst_24 = arith.constant dense<0.000000e+00> : vector<1x128xf32>
    %178 = tpu.matmul %177, %3, %cst_24 {dimension_numbers = #tpu.dot_dimension_numbers<[1], [0], [0], [1], [0, 0, 1, 1], [], []>} : vector<1x512xbf16>, vector<512x128xbf16>, vector<1x128xf32> -> vector<1x128xf32>
    %179 = arith.addf %178, %4 : vector<1x128xf32>
    %cst_25 = arith.constant 0.000000e+00 : f32
    %180 = vector.broadcast %cst_25 : f32 to vector<1x128xf32>
    %181 = arith.maximumf %179, %180 : vector<1x128xf32>
    %182 = tpu.concatenate %67, %76, %103, %112 in 1 : vector<1x128xbf16>, vector<1x128xbf16>, vector<1x128xbf16>, vector<1x128xbf16> -> vector<1x512xbf16>
    %cst_26 = arith.constant dense<0.000000e+00> : vector<1x128xf32>
    %183 = tpu.matmul %182, %3, %cst_26 {dimension_numbers = #tpu.dot_dimension_numbers<[1], [0], [0], [1], [0, 0, 1, 1], [], []>} : vector<1x512xbf16>, vector<512x128xbf16>, vector<1x128xf32> -> vector<1x128xf32>
    %184 = arith.addf %183, %4 : vector<1x128xf32>
    %cst_27 = arith.constant 0.000000e+00 : f32
    %185 = vector.broadcast %cst_27 : f32 to vector<1x128xf32>
    %186 = arith.maximumf %184, %185 : vector<1x128xf32>
    %187 = tpu.concatenate %76, %85, %112, %121 in 1 : vector<1x128xbf16>, vector<1x128xbf16>, vector<1x128xbf16>, vector<1x128xbf16> -> vector<1x512xbf16>
    %cst_28 = arith.constant dense<0.000000e+00> : vector<1x128xf32>
    %188 = tpu.matmul %187, %3, %cst_28 {dimension_numbers = #tpu.dot_dimension_numbers<[1], [0], [0], [1], [0, 0, 1, 1], [], []>} : vector<1x512xbf16>, vector<512x128xbf16>, vector<1x128xf32> -> vector<1x128xf32>
    %189 = arith.addf %188, %4 : vector<1x128xf32>
    %cst_29 = arith.constant 0.000000e+00 : f32
    %190 = vector.broadcast %cst_29 : f32 to vector<1x128xf32>
    %191 = arith.maximumf %189, %190 : vector<1x128xf32>
    %192 = tpu.concatenate %85, %94, %121, %130 in 1 : vector<1x128xbf16>, vector<1x128xbf16>, vector<1x128xbf16>, vector<1x128xbf16> -> vector<1x512xbf16>
    %cst_30 = arith.constant dense<0.000000e+00> : vector<1x128xf32>
    %193 = tpu.matmul %192, %3, %cst_30 {dimension_numbers = #tpu.dot_dimension_numbers<[1], [0], [0], [1], [0, 0, 1, 1], [], []>} : vector<1x512xbf16>, vector<512x128xbf16>, vector<1x128xf32> -> vector<1x128xf32>
    %194 = arith.addf %193, %4 : vector<1x128xf32>
    %cst_31 = arith.constant 0.000000e+00 : f32
    %195 = vector.broadcast %cst_31 : f32 to vector<1x128xf32>
    %196 = arith.maximumf %194, %195 : vector<1x128xf32>
    %197 = tpu.concatenate %103, %112, %139, %148 in 1 : vector<1x128xbf16>, vector<1x128xbf16>, vector<1x128xbf16>, vector<1x128xbf16> -> vector<1x512xbf16>
    %cst_32 = arith.constant dense<0.000000e+00> : vector<1x128xf32>
    %198 = tpu.matmul %197, %3, %cst_32 {dimension_numbers = #tpu.dot_dimension_numbers<[1], [0], [0], [1], [0, 0, 1, 1], [], []>} : vector<1x512xbf16>, vector<512x128xbf16>, vector<1x128xf32> -> vector<1x128xf32>
    %199 = arith.addf %198, %4 : vector<1x128xf32>
    %cst_33 = arith.constant 0.000000e+00 : f32
    %200 = vector.broadcast %cst_33 : f32 to vector<1x128xf32>
    %201 = arith.maximumf %199, %200 : vector<1x128xf32>
    %202 = tpu.concatenate %112, %121, %148, %157 in 1 : vector<1x128xbf16>, vector<1x128xbf16>, vector<1x128xbf16>, vector<1x128xbf16> -> vector<1x512xbf16>
    %cst_34 = arith.constant dense<0.000000e+00> : vector<1x128xf32>
    %203 = tpu.matmul %202, %3, %cst_34 {dimension_numbers = #tpu.dot_dimension_numbers<[1], [0], [0], [1], [0, 0, 1, 1], [], []>} : vector<1x512xbf16>, vector<512x128xbf16>, vector<1x128xf32> -> vector<1x128xf32>
    %204 = arith.addf %203, %4 : vector<1x128xf32>
    %cst_35 = arith.constant 0.000000e+00 : f32
    %205 = vector.broadcast %cst_35 : f32 to vector<1x128xf32>
    %206 = arith.maximumf %204, %205 : vector<1x128xf32>
    %207 = tpu.concatenate %121, %130, %157, %166 in 1 : vector<1x128xbf16>, vector<1x128xbf16>, vector<1x128xbf16>, vector<1x128xbf16> -> vector<1x512xbf16>
    %cst_36 = arith.constant dense<0.000000e+00> : vector<1x128xf32>
    %208 = tpu.matmul %207, %3, %cst_36 {dimension_numbers = #tpu.dot_dimension_numbers<[1], [0], [0], [1], [0, 0, 1, 1], [], []>} : vector<1x512xbf16>, vector<512x128xbf16>, vector<1x128xf32> -> vector<1x128xf32>
    %209 = arith.addf %208, %4 : vector<1x128xf32>
    %cst_37 = arith.constant 0.000000e+00 : f32
    %210 = vector.broadcast %cst_37 : f32 to vector<1x128xf32>
    %211 = arith.maximumf %209, %210 : vector<1x128xf32>
    %212 = vector.extract_strided_slice %171 {offsets = [0, 0], sizes = [1, 64], strides = [1, 1]} : vector<1x128xf32> to vector<1x64xf32>
    %213 = vector.extract_strided_slice %176 {offsets = [0, 0], sizes = [1, 64], strides = [1, 1]} : vector<1x128xf32> to vector<1x64xf32>
    %214 = vector.extract_strided_slice %181 {offsets = [0, 0], sizes = [1, 64], strides = [1, 1]} : vector<1x128xf32> to vector<1x64xf32>
    %215 = vector.extract_strided_slice %186 {offsets = [0, 0], sizes = [1, 64], strides = [1, 1]} : vector<1x128xf32> to vector<1x64xf32>
    %216 = vector.extract_strided_slice %191 {offsets = [0, 0], sizes = [1, 64], strides = [1, 1]} : vector<1x128xf32> to vector<1x64xf32>
    %217 = vector.extract_strided_slice %196 {offsets = [0, 0], sizes = [1, 64], strides = [1, 1]} : vector<1x128xf32> to vector<1x64xf32>
    %218 = vector.extract_strided_slice %201 {offsets = [0, 0], sizes = [1, 64], strides = [1, 1]} : vector<1x128xf32> to vector<1x64xf32>
    %219 = vector.extract_strided_slice %206 {offsets = [0, 0], sizes = [1, 64], strides = [1, 1]} : vector<1x128xf32> to vector<1x64xf32>
    %220 = vector.extract_strided_slice %211 {offsets = [0, 0], sizes = [1, 64], strides = [1, 1]} : vector<1x128xf32> to vector<1x64xf32>
    %221 = tpu.concatenate %212, %213, %214, %215, %216, %217, %218, %219, %220 in 1 : vector<1x64xf32>, vector<1x64xf32>, vector<1x64xf32>, vector<1x64xf32>, vector<1x64xf32>, vector<1x64xf32>, vector<1x64xf32>, vector<1x64xf32>, vector<1x64xf32> -> vector<1x576xf32>
    %222 = arith.truncf %221 : vector<1x576xf32> to vector<1x576xbf16>
    %cst_38 = arith.constant dense<0.000000e+00> : vector<1x128xf32>
    %223 = tpu.matmul %222, %5, %cst_38 {dimension_numbers = #tpu.dot_dimension_numbers<[1], [0], [0], [1], [0, 0, 1, 1], [], []>} : vector<1x576xbf16>, vector<576x128xbf16>, vector<1x128xf32> -> vector<1x128xf32>
    %224 = arith.addf %223, %6 : vector<1x128xf32>
    %cst_39 = arith.constant 0.000000e+00 : f32
    %225 = vector.broadcast %cst_39 : f32 to vector<1x128xf32>
    %226 = arith.maximumf %224, %225 : vector<1x128xf32>
    %227 = vector.extract_strided_slice %226 {offsets = [0, 0], sizes = [1, 64], strides = [1, 1]} : vector<1x128xf32> to vector<1x64xf32>
    %228 = arith.truncf %227 : vector<1x64xf32> to vector<1x64xbf16>
    %cst_40 = arith.constant dense<0.000000e+00> : vector<1x128xf32>
    %229 = tpu.matmul %228, %7, %cst_40 {dimension_numbers = #tpu.dot_dimension_numbers<[1], [0], [0], [1], [0, 0, 1, 1], [], []>} : vector<1x64xbf16>, vector<64x128xbf16>, vector<1x128xf32> -> vector<1x128xf32>
    %230 = arith.addf %229, %8 : vector<1x128xf32>
    %cst_41 = arith.constant 0.000000e+00 : f32
    %231 = vector.broadcast %cst_41 : f32 to vector<1x128xf32>
    %232 = arith.maximumf %230, %231 : vector<1x128xf32>
    %c0_42 = arith.constant 0 : index
    %c0_43 = arith.constant 0 : index
    %c0_44 = arith.constant 0 : index
    %233 = vector.load %arg10[%c0_42, %c0_43, %c0_44] : memref<1x1x128xf32, #tpu.memory_space<vmem>>, vector<1x1x128xf32>
    %234 = vector.shape_cast %233 : vector<1x1x128xf32> to vector<1x128xf32>
    %235 = vector.shape_cast %232 : vector<1x128xf32> to vector<1x1x128xf32>
    tpu.vector_store %arg10[%c0_42, %c0_43, %c0_44], %235 {strides = array<i32>} : memref<1x1x128xf32, #tpu.memory_space<vmem>>, vector<1x1x128xf32>,
    return
  }
  func.func @transform_0(%arg0: i32) -> (i32, i32, i32, i32) {
    %c0_i32 = arith.constant 0 : i32
    %c0_i32_0 = arith.constant 0 : i32
    %c0_i32_1 = arith.constant 0 : i32
    %c0_i32_2 = arith.constant 0 : i32
    return %arg0, %c0_i32, %c0_i32_0, %c0_i32_1 : i32, i32, i32, i32
  }
  func.func @transform_1(%arg0: i32) -> (i32, i32) {
    %c0_i32 = arith.constant 0 : i32
    %c0_i32_0 = arith.constant 0 : i32
    %c0_i32_1 = arith.constant 0 : i32
    return %c0_i32, %c0_i32_0 : i32, i32
  }
  func.func @transform_2(%arg0: i32) -> (i32, i32) {
    %c0_i32 = arith.constant 0 : i32
    %c0_i32_0 = arith.constant 0 : i32
    %c0_i32_1 = arith.constant 0 : i32
    return %c0_i32, %c0_i32_0 : i32, i32
  }
  func.func @transform_3(%arg0: i32) -> (i32, i32) {
    %c0_i32 = arith.constant 0 : i32
    %c0_i32_0 = arith.constant 0 : i32
    %c0_i32_1 = arith.constant 0 : i32
    return %c0_i32, %c0_i32_0 : i32, i32
  }
  func.func @transform_4(%arg0: i32) -> (i32, i32) {
    %c0_i32 = arith.constant 0 : i32
    %c0_i32_0 = arith.constant 0 : i32
    %c0_i32_1 = arith.constant 0 : i32
    return %c0_i32, %c0_i32_0 : i32, i32
  }
  func.func @transform_5(%arg0: i32) -> (i32, i32) {
    %c0_i32 = arith.constant 0 : i32
    %c0_i32_0 = arith.constant 0 : i32
    %c0_i32_1 = arith.constant 0 : i32
    return %c0_i32, %c0_i32_0 : i32, i32
  }
  func.func @transform_6(%arg0: i32) -> (i32, i32) {
    %c0_i32 = arith.constant 0 : i32
    %c0_i32_0 = arith.constant 0 : i32
    %c0_i32_1 = arith.constant 0 : i32
    return %c0_i32, %c0_i32_0 : i32, i32
  }
  func.func @transform_7(%arg0: i32) -> (i32, i32) {
    %c0_i32 = arith.constant 0 : i32
    %c0_i32_0 = arith.constant 0 : i32
    %c0_i32_1 = arith.constant 0 : i32
    return %c0_i32, %c0_i32_0 : i32, i32
  }
  func.func @transform_8(%arg0: i32) -> (i32, i32) {
    %c0_i32 = arith.constant 0 : i32
    %c0_i32_0 = arith.constant 0 : i32
    %c0_i32_1 = arith.constant 0 : i32
    return %c0_i32, %c0_i32_0 : i32, i32
  }
  func.func @transform_9(%arg0: i32) -> (i32, i32, i32) {
    %c0_i32 = arith.constant 0 : i32
    %c0_i32_0 = arith.constant 0 : i32
    %c0_i32_1 = arith.constant 0 : i32
    return %arg0, %c0_i32, %c0_i32_0 : i32, i32, i32
  }
}

</mosaic_0001>

<llo_original>
// kernel: encoder_forward.1
$region0: #{encoder_forward.1}
  #allocation0 [shape = 'u32[]', space=smem, size = 0x4, offset = 0x4, fixed_abs, tag = 'smem constant byte address 0x4 - core index']
  #allocation1 [shape = 'u32[144,128]{1,0:T(1,128)}', space=vmem, size = 0x12000, scoped, tag = 'internal scratch']
  %s0 = inlined_call_operand.vmem [shape: bf16[2,9,9,64], index: 0, kind: input, shape index: {}]
  %s1 = inlined_call_operand.vmem [shape: bf16[256,128], index: 1, kind: input, shape index: {}]
  %s2 = inlined_call_operand.vmem [shape: f32[1,128], index: 2, kind: input, shape index: {}]
  %s3 = inlined_call_operand.vmem [shape: bf16[512,128], index: 3, kind: input, shape index: {}]
  %s4 = inlined_call_operand.vmem [shape: f32[1,128], index: 4, kind: input, shape index: {}]
  %s5 = inlined_call_operand.vmem [shape: bf16[576,128], index: 5, kind: input, shape index: {}]
  %s6 = inlined_call_operand.vmem [shape: f32[1,128], index: 6, kind: input, shape index: {}]
  %s7 = inlined_call_operand.vmem [shape: bf16[64,128], index: 7, kind: input, shape index: {}]
  %s8 = inlined_call_operand.vmem [shape: f32[1,128], index: 8, kind: input, shape index: {}]
  %s9 = inlined_call_operand.hbm [shape: f32[2,1,128], index: 9, kind: output, shape index: {}]
  %s10 = sld [smem:[#allocation0]]
  $region69: #{encoder_forward.1} parent=0
    _
  %s12 = ssub.s32 1, %s10
  %s13 = scalar_select 0, %s12, %s10
  $region1: #{encoder_forward.1} parent=0
    #allocation2 [shape = 'u8[1024]{0}', space=vmem, size = 0x400, scoped, tag = 'output window, operand 0']
    #allocation3 [shape = 's32[2]{0}', space=sflag, size = 0x8, scoped, tag = 'scoped memory for encoder_forward.1']
    %14 = vsyncpa [#allocation3], 0
    %s15 = scalar_lea.sflag [#allocation3], 1
    %16 = vsyncpa %s15, 0
    loop: start=0, step=1, limit=4
    $region2: #{encoder_forward.1} parent=1 // loop_pre_header
      _
    $region3: #{encoder_forward.1} parent=1 // loop_header
      %s18 = sphi 0, %s22
      %p19 = scmp.ge.s32.totalorder %s18, 4
      %s28 = sphi 0, %s30
      %s31 = sphi 0, %s28
      %s32 = sphi 0, %s31
      %s48 = sphi 0, %s32
      %s52 = sphi 0, %s52
      %s54 = sphi 0, %s52
      %s55 = sphi 0, %s54
      %s69 = sphi 0, %s55
      %s73 = sphi 0, %s73
      %s75 = sphi 0, %s73
      %s76 = sphi 0, %s75
      %s90 = sphi 0, %s76
      %s94 = sphi 0, %s94
      %s96 = sphi 0, %s94
      %s97 = sphi 0, %s96
      %s111 = sphi 0, %s97
      %s115 = sphi 0, %s115
      %s117 = sphi 0, %s115
      %s118 = sphi 0, %s117
      %s132 = sphi 0, %s118
      %s136 = sphi 0, %s136
      %s138 = sphi 0, %s136
      %s139 = sphi 0, %s138
      %s153 = sphi 0, %s139
      %s157 = sphi 0, %s157
      %s159 = sphi 0, %s157
      %s160 = sphi 0, %s159
      %s174 = sphi 0, %s160
      %s178 = sphi 0, %s178
      %s180 = sphi 0, %s178
      %s181 = sphi 0, %s180
      %s195 = sphi 0, %s181
      %s199 = sphi 0, %s199
      %s201 = sphi 0, %s199
      %s202 = sphi 0, %s201
      %s216 = sphi 0, %s202
      %s222 = sphi 0, %s224
      %s225 = sphi 0, %s222
      %s226 = sphi 0, %s225
      %s242 = sphi 0, %s226
    $region4: #{encoder_forward.1} parent=1 // loop_header_branch
      %21 = sbr.rel (%p19) target = $region8
    $region5: #{encoder_forward.1} parent=1 // loop_body
      %s23 = ssub.s32 %s18, 1
      %s24 = ssub.s32 %s18, 2
      %s25 = sadd.s32 %s18, 1
      %s26 = ssub.s32 %s18, %s25
      %p27 = scmp.eq.s32.totalorder %s26, 0
      %s29 = sadd.s32 %s28, 1
      %s30 = scalar_select %p27, %s28, %s29
      %p33 = pneg %p27
      %p34 = scmp.eq.s32.totalorder %s18, 1
      %p35 = por %p33, %p34
      %p36 = scmp.ne.s32.totalorder %s28, %s31
      %p37 = scmp.eq.s32.totalorder %s18, 0
      %p38 = por %p36, %p37
      %p39 = scmp.ne.s32.totalorder %s28, %s31
      %p40 = scmp.eq.s32.totalorder %s23, 1
      %p41 = por %p39, %p40
      %p42 = scmp.ne.s32.totalorder %s31, %s32
      %p43 = scmp.eq.s32.totalorder %s23, 0
      %p44 = por %p42, %p43
      %p45 = scmp.ne.s32.totalorder %s31, %s32
      %p46 = scmp.eq.s32.totalorder %s24, 1
      %p47 = por %p45, %p46
      %p49 = scmp.ne.s32.totalorder %s32, %s48
      %p50 = scmp.eq.s32.totalorder %s24, 0
      %p51 = por %p49, %p50
      %s53 = sadd.s32 %s52, 1
      %p56 = scmp.eq.s32.totalorder %s18, 1
      %p57 = scmp.ne.s32.totalorder %s52, %s54
      %p58 = scmp.eq.s32.totalorder %s18, 0
      %p59 = por %p57, %p58
      %p60 = scmp.ne.s32.totalorder %s52, %s54
      %p61 = scmp.eq.s32.totalorder %s23, 1
      %p62 = por %p60, %p61
      %p63 = scmp.ne.s32.totalorder %s54, %s55
      %p64 = scmp.eq.s32.totalorder %s23, 0
      %p65 = por %p63, %p64
      %p66 = scmp.ne.s32.totalorder %s54, %s55
      %p67 = scmp.eq.s32.totalorder %s24, 1
      %p68 = por %p66, %p67
      %p70 = scmp.ne.s32.totalorder %s55, %s69
      %p71 = scmp.eq.s32.totalorder %s24, 0
      %p72 = por %p70, %p71
      %s74 = sadd.s32 %s73, 1
      %p77 = scmp.eq.s32.totalorder %s18, 1
      %p78 = scmp.ne.s32.totalorder %s73, %s75
      %p79 = scmp.eq.s32.totalorder %s18, 0
      %p80 = por %p78, %p79
      %p81 = scmp.ne.s32.totalorder %s73, %s75
      %p82 = scmp.eq.s32.totalorder %s23, 1
      %p83 = por %p81, %p82
      %p84 = scmp.ne.s32.totalorder %s75, %s76
      %p85 = scmp.eq.s32.totalorder %s23, 0
      %p86 = por %p84, %p85
      %p87 = scmp.ne.s32.totalorder %s75, %s76
      %p88 = scmp.eq.s32.totalorder %s24, 1
      %p89 = por %p87, %p88
      %p91 = scmp.ne.s32.totalorder %s76, %s90
      %p92 = scmp.eq.s32.totalorder %s24, 0
      %p93 = por %p91, %p92
      %s95 = sadd.s32 %s94, 1
      %p98 = scmp.eq.s32.totalorder %s18, 1
      %p99 = scmp.ne.s32.totalorder %s94, %s96
      %p100 = scmp.eq.s32.totalorder %s18, 0
      %p101 = por %p99, %p100
      %p102 = scmp.ne.s32.totalorder %s94, %s96
      %p103 = scmp.eq.s32.totalorder %s23, 1
      %p104 = por %p102, %p103
      %p105 = scmp.ne.s32.totalorder %s96, %s97
      %p106 = scmp.eq.s32.totalorder %s23, 0
      %p107 = por %p105, %p106
      %p108 = scmp.ne.s32.totalorder %s96, %s97
      %p109 = scmp.eq.s32.totalorder %s24, 1
      %p110 = por %p108, %p109
      %p112 = scmp.ne.s32.totalorder %s97, %s111
      %p113 = scmp.eq.s32.totalorder %s24, 0
      %p114 = por %p112, %p113
      %s116 = sadd.s32 %s115, 1
      %p119 = scmp.eq.s32.totalorder %s18, 1
      %p120 = scmp.ne.s32.totalorder %s115, %s117
      %p121 = scmp.eq.s32.totalorder %s18, 0
      %p122 = por %p120, %p121
      %p123 = scmp.ne.s32.totalorder %s115, %s117
      %p124 = scmp.eq.s32.totalorder %s23, 1
      %p125 = por %p123, %p124
      %p126 = scmp.ne.s32.totalorder %s117, %s118
      %p127 = scmp.eq.s32.totalorder %s23, 0
      %p128 = por %p126, %p127
      %p129 = scmp.ne.s32.totalorder %s117, %s118
      %p130 = scmp.eq.s32.totalorder %s24, 1
      %p131 = por %p129, %p130
      %p133 = scmp.ne.s32.totalorder %s118, %s132
      %p134 = scmp.eq.s32.totalorder %s24, 0
      %p135 = por %p133, %p134
      %s137 = sadd.s32 %s136, 1
      %p140 = scmp.eq.s32.totalorder %s18, 1
      %p141 = scmp.ne.s32.totalorder %s136, %s138
      %p142 = scmp.eq.s32.totalorder %s18, 0
      %p143 = por %p141, %p142
      %p144 = scmp.ne.s32.totalorder %s136, %s138
      %p145 = scmp.eq.s32.totalorder %s23, 1
      %p146 = por %p144, %p145
      %p147 = scmp.ne.s32.totalorder %s138, %s139
      %p148 = scmp.eq.s32.totalorder %s23, 0
      %p149 = por %p147, %p148
      %p150 = scmp.ne.s32.totalorder %s138, %s139
      %p151 = scmp.eq.s32.totalorder %s24, 1
      %p152 = por %p150, %p151
      %p154 = scmp.ne.s32.totalorder %s139, %s153
      %p155 = scmp.eq.s32.totalorder %s24, 0
      %p156 = por %p154, %p155
      %s158 = sadd.s32 %s157, 1
      %p161 = scmp.eq.s32.totalorder %s18, 1
      %p162 = scmp.ne.s32.totalorder %s157, %s159
      %p163 = scmp.eq.s32.totalorder %s18, 0
      %p164 = por %p162, %p163
      %p165 = scmp.ne.s32.totalorder %s157, %s159
      %p166 = scmp.eq.s32.totalorder %s23, 1
      %p167 = por %p165, %p166
      %p168 = scmp.ne.s32.totalorder %s159, %s160
      %p169 = scmp.eq.s32.totalorder %s23, 0
      %p170 = por %p168, %p169
      %p171 = scmp.ne.s32.totalorder %s159, %s160
      %p172 = scmp.eq.s32.totalorder %s24, 1
      %p173 = por %p171, %p172
      %p175 = scmp.ne.s32.totalorder %s160, %s174
      %p176 = scmp.eq.s32.totalorder %s24, 0
      %p177 = por %p175, %p176
      %s179 = sadd.s32 %s178, 1
      %p182 = scmp.eq.s32.totalorder %s18, 1
      %p183 = scmp.ne.s32.totalorder %s178, %s180
      %p184 = scmp.eq.s32.totalorder %s18, 0
      %p185 = por %p183, %p184
      %p186 = scmp.ne.s32.totalorder %s178, %s180
      %p187 = scmp.eq.s32.totalorder %s23, 1
      %p188 = por %p186, %p187
      %p189 = scmp.ne.s32.totalorder %s180, %s181
      %p190 = scmp.eq.s32.totalorder %s23, 0
      %p191 = por %p189, %p190
      %p192 = scmp.ne.s32.totalorder %s180, %s181
      %p193 = scmp.eq.s32.totalorder %s24, 1
      %p194 = por %p192, %p193
      %p196 = scmp.ne.s32.totalorder %s181, %s195
      %p197 = scmp.eq.s32.totalorder %s24, 0
      %p198 = por %p196, %p197
      %s200 = sadd.s32 %s199, 1
      %p203 = scmp.eq.s32.totalorder %s18, 1
      %p204 = scmp.ne.s32.totalorder %s199, %s201
      %p205 = scmp.eq.s32.totalorder %s18, 0
      %p206 = por %p204, %p205
      %p207 = scmp.ne.s32.totalorder %s199, %s201
      %p208 = scmp.eq.s32.totalorder %s23, 1
      %p209 = por %p207, %p208
      %p210 = scmp.ne.s32.totalorder %s201, %s202
      %p211 = scmp.eq.s32.totalorder %s23, 0
      %p212 = por %p210, %p211
      %p213 = scmp.ne.s32.totalorder %s201, %s202
      %p214 = scmp.eq.s32.totalorder %s24, 1
      %p215 = por %p213, %p214
      %p217 = scmp.ne.s32.totalorder %s202, %s216
      %p218 = scmp.eq.s32.totalorder %s24, 0
      %p219 = por %p217, %p218
      %s220 = ssub.s32 %s18, %s25
      %p221 = scmp.eq.s32.totalorder %s220, 0
      %s223 = sadd.s32 %s222, 1
      %s224 = scalar_select %p221, %s222, %s223
      %p227 = pneg %p221
      %p228 = scmp.eq.s32.totalorder %s18, 1
      %p229 = por %p227, %p228
      %p230 = scmp.ne.s32.totalorder %s222, %s225
      %p231 = scmp.eq.s32.totalorder %s18, 0
      %p232 = por %p230, %p231
      %p233 = scmp.ne.s32.totalorder %s222, %s225
      %p234 = scmp.eq.s32.totalorder %s23, 1
      %p235 = por %p233, %p234
      %p236 = scmp.ne.s32.totalorder %s225, %s226
      %p237 = scmp.eq.s32.totalorder %s23, 0
      %p238 = por %p236, %p237
      %p239 = scmp.ne.s32.totalorder %s225, %s226
      %p240 = scmp.eq.s32.totalorder %s24, 1
      %p241 = por %p239, %p240
      %p243 = scmp.ne.s32.totalorder %s226, %s242
      %p244 = scmp.eq.s32.totalorder %s24, 0
      %p245 = por %p243, %p244
      %p246 = scmp.le.s32.totalorder 1, %s18
      %p247 = scmp.lt.s32.totalorder %s18, 3
      %p248 = pnand %p246, %p247
      %p249 = pneg %p248
      // Predicated region
      $region9: #{encoder_forward.1} parent=5 // pred_check
        _
      $region10: #{encoder_forward.1} parent=5 // pred_check_branch
        %251 = sbr.rel (%p248) target = $region12
      $region11: #{encoder_forward.1} parent=5 // pred_region
        %s252 = ssub.s32 %s18, 1
        // Predicated region
        $region13: #{encoder_forward.1} parent=11 // pred_check
          %p253 = pneg %p65
        $region14: #{encoder_forward.1} parent=11 // pred_check_branch
          %255 = sbr.rel (%p253) target = $region16
        $region15: #{encoder_forward.1} parent=11 // pred_region
          _
        $region16: #{encoder_forward.1} parent=11 // pred_fallthru
          _
        // Predicated region
        $region17: #{encoder_forward.1} parent=11 // pred_check
          %p256 = pneg %p86
        $region18: #{encoder_forward.1} parent=11 // pred_check_branch
          %258 = sbr.rel (%p256) target = $region20
        $region19: #{encoder_forward.1} parent=11 // pred_region
          _
        $region20: #{encoder_forward.1} parent=11 // pred_fallthru
          _
        // Predicated region
        $region21: #{encoder_forward.1} parent=11 // pred_check
          %p259 = pneg %p107
        $region22: #{encoder_forward.1} parent=11 // pred_check_branch
          %261 = sbr.rel (%p259) target = $region24
        $region23: #{encoder_forward.1} parent=11 // pred_region
          _
        $region24: #{encoder_forward.1} parent=11 // pred_fallthru
          _
        // Predicated region
        $region25: #{encoder_forward.1} parent=11 // pred_check
          %p262 = pneg %p128
        $region26: #{encoder_forward.1} parent=11 // pred_check_branch
          %264 = sbr.rel (%p262) target = $region28
        $region27: #{encoder_forward.1} parent=11 // pred_region
          _
        $region28: #{encoder_forward.1} parent=11 // pred_fallthru
          _
        // Predicated region
        $region29: #{encoder_forward.1} parent=11 // pred_check
          %p265 = pneg %p149
        $region30: #{encoder_forward.1} parent=11 // pred_check_branch
          %267 = sbr.rel (%p265) target = $region32
        $region31: #{encoder_forward.1} parent=11 // pred_region
          _
        $region32: #{encoder_forward.1} parent=11 // pred_fallthru
          _
        // Predicated region
        $region33: #{encoder_forward.1} parent=11 // pred_check
          %p268 = pneg %p170
        $region34: #{encoder_forward.1} parent=11 // pred_check_branch
          %270 = sbr.rel (%p268) target = $region36
        $region35: #{encoder_forward.1} parent=11 // pred_region
          _
        $region36: #{encoder_forward.1} parent=11 // pred_fallthru
          _
        // Predicated region
        $region37: #{encoder_forward.1} parent=11 // pred_check
          %p271 = pneg %p191
        $region38: #{encoder_forward.1} parent=11 // pred_check_branch
          %273 = sbr.rel (%p271) target = $region40
        $region39: #{encoder_forward.1} parent=11 // pred_region
          _
        $region40: #{encoder_forward.1} parent=11 // pred_fallthru
          _
        // Predicated region
        $region41: #{encoder_forward.1} parent=11 // pred_check
          %p274 = pneg %p212
        $region42: #{encoder_forward.1} parent=11 // pred_check_branch
          %276 = sbr.rel (%p274) target = $region44
        $region43: #{encoder_forward.1} parent=11 // pred_region
          _
        $region44: #{encoder_forward.1} parent=11 // pred_fallthru
          _
      $region12: #{encoder_forward.1} parent=5 // pred_fallthru
        _
      %p277 = scmp.lt.s32.totalorder %s18, 2
      // Predicated region
      $region45: #{encoder_forward.1} parent=5 // pred_check
        %p278 = pneg %p277
      $region46: #{encoder_forward.1} parent=5 // pred_check_branch
        %280 = sbr.rel (%p278) target = $region48
      $region47: #{encoder_forward.1} parent=5 // pred_region
        // Predicated region
        $region49: #{encoder_forward.1} parent=47 // pred_check
          %p281 = pneg %p38
        $region50: #{encoder_forward.1} parent=47 // pred_check_branch
          %283 = sbr.rel (%p281) target = $region52
        $region51: #{encoder_forward.1} parent=47 // pred_region
          %p284 = scmp.lt.s32.totalorder %s18, 1
          %s285 = scalar_select %p284, %s18, 1
          %s286 = smul.addr %s285, 18
          %s287 = smul.addr %s286, 4
          %s288 = scalar_lea.vmem %s0, %s287
        $region52: #{encoder_forward.1} parent=47 // pred_fallthru
          _
      $region48: #{encoder_forward.1} parent=5 // pred_fallthru
        _
      %p289 = scmp.le.s32.totalorder 1, %s18
      %p290 = scmp.lt.s32.totalorder %s18, 3
      %p291 = pnand %p289, %p290
      %p292 = pneg %p291
      // Predicated region
      $region53: #{encoder_forward.1} parent=5 // pred_check
        _
      $region54: #{encoder_forward.1} parent=5 // pred_check_branch
        %294 = sbr.rel (%p291) target = $region56
      $region55: #{encoder_forward.1} parent=5 // pred_region
        %s295 = ssub.s32 %s18, 1
        %p296 = scmp.lt.s32.totalorder %s23, 1
        %s297 = scalar_select %p296, %s23, 1
        %s298 = smul.addr %s297, 18
        %s299 = smul.addr %s298, 4
        %s300 = scalar_lea.vmem %s0, %s299
        %p301 = pneg %p44
        %p302 = pneg %p41
        %p303 = pneg %p65
        %p304 = pneg %p62
        %p305 = pneg %p86
        %p306 = pneg %p83
        %p307 = pneg %p107
        %p308 = pneg %p104
        %p309 = pneg %p128
        %p310 = pneg %p125
        %p311 = pneg %p149
        %p312 = pneg %p146
        %p313 = pneg %p170
        %p314 = pneg %p167
        %p315 = pneg %p191
        %p316 = pneg %p188
        %p317 = pneg %p212
        %p318 = pneg %p209
        %p319 = pneg %p238
        %p320 = pneg %p235
        %s321 = sand.u32 %s225, 1
        %s322 = scalar_lea.sflag [#allocation3], %s321
        %s323 = sand.u32 %s225, 1
        %s324 = scalar_lea.vmem [#allocation2], %s323
        %p325 = scmp.lt.s32.totalorder %s23, 1
        %s326 = scalar_select %p325, %s23, 1
        %s327 = smul.addr %s326, 18
        %s328 = smul.addr %s327, 4
        %s329 = scalar_lea.vmem %s0, %s328
        %v331 = vld [vmem:[%s329] sm:$0xf]
        %v332 = vld [vmem:[%s329 + $0x4] sm:$0x1]
        %v333 = vld [vmem:[%s329 + $0x8] sm:$0xf]
        %v334 = vld [vmem:[%s329 + $0xc] sm:$0x1]
        %v335 = vld [vmem:[%s329 + $0x10] sm:$0xf]
        %v336 = vld [vmem:[%s329 + $0x14] sm:$0x1]
        %v337 = vld [vmem:[%s329 + $0x18] sm:$0xf]
        %v338 = vld [vmem:[%s329 + $0x1c] sm:$0x1]
        %v339 = vld [vmem:[%s329 + $0x20] sm:$0xf]
        %v340 = vld [vmem:[%s329 + $0x24] sm:$0x1]
        %v341 = vld [vmem:[%s329 + $0x28] sm:$0xf]
        %v342 = vld [vmem:[%s329 + $0x2c] sm:$0x1]
        %v343 = vld [vmem:[%s329 + $0x30] sm:$0xf]
        %v344 = vld [vmem:[%s329 + $0x34] sm:$0x1]
        %v345 = vld [vmem:[%s329 + $0x38] sm:$0xf]
        %v346 = vld [vmem:[%s329 + $0x3c] sm:$0x1]
        %v347 = vld [vmem:[%s329 + $0x40] sm:$0xf]
        %v348 = vld [vmem:[%s329 + $0x44] sm:$0x1]
        %v349 = vld [vmem:[%s1] sm:$0xf]
        %v350 = vld [vmem:[%s1 + $0x4] sm:$0xf]
        %v351 = vld [vmem:[%s1 + $0x8] sm:$0xf]
        %v352 = vld [vmem:[%s1 + $0xc] sm:$0xf]
        %v353 = vld [vmem:[%s1 + $0x10] sm:$0xf]
        %v354 = vld [vmem:[%s1 + $0x14] sm:$0xf]
        %v355 = vld [vmem:[%s1 + $0x18] sm:$0xf]
        %v356 = vld [vmem:[%s1 + $0x1c] sm:$0xf]
        %v357 = vld [vmem:[%s1 + $0x20] sm:$0xf]
        %v358 = vld [vmem:[%s1 + $0x24] sm:$0xf]
        %v359 = vld [vmem:[%s1 + $0x28] sm:$0xf]
        %v360 = vld [vmem:[%s1 + $0x2c] sm:$0xf]
        %v361 = vld [vmem:[%s1 + $0x30] sm:$0xf]
        %v362 = vld [vmem:[%s1 + $0x34] sm:$0xf]
        %v363 = vld [vmem:[%s1 + $0x38] sm:$0xf]
        %v364 = vld [vmem:[%s1 + $0x3c] sm:$0xf]
        %v365 = vld [vmem:[%s1 + $0x40] sm:$0xf]
        %v366 = vld [vmem:[%s1 + $0x44] sm:$0xf]
        %v367 = vld [vmem:[%s1 + $0x48] sm:$0xf]
        %v368 = vld [vmem:[%s1 + $0x4c] sm:$0xf]
        %v369 = vld [vmem:[%s1 + $0x50] sm:$0xf]
        %v370 = vld [vmem:[%s1 + $0x54] sm:$0xf]
        %v371 = vld [vmem:[%s1 + $0x58] sm:$0xf]
        %v372 = vld [vmem:[%s1 + $0x5c] sm:$0xf]
        %v373 = vld [vmem:[%s1 + $0x60] sm:$0xf]
        %v374 = vld [vmem:[%s1 + $0x64] sm:$0xf]
        %v375 = vld [vmem:[%s1 + $0x68] sm:$0xf]
        %v376 = vld [vmem:[%s1 + $0x6c] sm:$0xf]
        %v377 = vld [vmem:[%s1 + $0x70] sm:$0xf]
        %v378 = vld [vmem:[%s1 + $0x74] sm:$0xf]
        %v379 = vld [vmem:[%s1 + $0x78] sm:$0xf]
        %v380 = vld [vmem:[%s1 + $0x7c] sm:$0xf]
        %v381 = vld [vmem:[%s2] sm:$0x1]
        %v382 = vld [vmem:[%s3] sm:$0xf]
        %v383 = vld [vmem:[%s3 + $0x4] sm:$0xf]
        %v384 = vld [vmem:[%s3 + $0x8] sm:$0xf]
        %v385 = vld [vmem:[%s3 + $0xc] sm:$0xf]
        %v386 = vld [vmem:[%s3 + $0x10] sm:$0xf]
        %v387 = vld [vmem:[%s3 + $0x14] sm:$0xf]
        %v388 = vld [vmem:[%s3 + $0x18] sm:$0xf]
        %v389 = vld [vmem:[%s3 + $0x1c] sm:$0xf]
        %v390 = vld [vmem:[%s3 + $0x20] sm:$0xf]
        %v391 = vld [vmem:[%s3 + $0x24] sm:$0xf]
        %v392 = vld [vmem:[%s3 + $0x28] sm:$0xf]
        %v393 = vld [vmem:[%s3 + $0x2c] sm:$0xf]
        %v394 = vld [vmem:[%s3 + $0x30] sm:$0xf]
        %v395 = vld [vmem:[%s3 + $0x34] sm:$0xf]
        %v396 = vld [vmem:[%s3 + $0x38] sm:$0xf]
        %v397 = vld [vmem:[%s3 + $0x3c] sm:$0xf]
        %v398 = vld [vmem:[%s3 + $0x40] sm:$0xf]
        %v399 = vld [vmem:[%s3 + $0x44] sm:$0xf]
        %v400 = vld [vmem:[%s3 + $0x48] sm:$0xf]
        %v401 = vld [vmem:[%s3 + $0x4c] sm:$0xf]
        %v402 = vld [vmem:[%s3 + $0x50] sm:$0xf]
        %v403 = vld [vmem:[%s3 + $0x54] sm:$0xf]
        %v404 = vld [vmem:[%s3 + $0x58] sm:$0xf]
        %v405 = vld [vmem:[%s3 + $0x5c] sm:$0xf]
        %v406 = vld [vmem:[%s3 + $0x60] sm:$0xf]
        %v407 = vld [vmem:[%s3 + $0x64] sm:$0xf]
        %v408 = vld [vmem:[%s3 + $0x68] sm:$0xf]
        %v409 = vld [vmem:[%s3 + $0x6c] sm:$0xf]
        %v410 = vld [vmem:[%s3 + $0x70] sm:$0xf]
        %v411 = vld [vmem:[%s3 + $0x74] sm:$0xf]
        %v412 = vld [vmem:[%s3 + $0x78] sm:$0xf]
        %v413 = vld [vmem:[%s3 + $0x7c] sm:$0xf]
        %v414 = vld [vmem:[%s3 + $0x80] sm:$0xf]
        %v415 = vld [vmem:[%s3 + $0x84] sm:$0xf]
        %v416 = vld [vmem:[%s3 + $0x88] sm:$0xf]
        %v417 = vld [vmem:[%s3 + $0x8c] sm:$0xf]
        %v418 = vld [vmem:[%s3 + $0x90] sm:$0xf]
        %v419 = vld [vmem:[%s3 + $0x94] sm:$0xf]
        %v420 = vld [vmem:[%s3 + $0x98] sm:$0xf]
        %v421 = vld [vmem:[%s3 + $0x9c] sm:$0xf]
        %v422 = vld [vmem:[%s3 + $0xa0] sm:$0xf]
        %v423 = vld [vmem:[%s3 + $0xa4] sm:$0xf]
        %v424 = vld [vmem:[%s3 + $0xa8] sm:$0xf]
        %v425 = vld [vmem:[%s3 + $0xac] sm:$0xf]
        %v426 = vld [vmem:[%s3 + $0xb0] sm:$0xf]
        %v427 = vld [vmem:[%s3 + $0xb4] sm:$0xf]
        %v428 = vld [vmem:[%s3 + $0xb8] sm:$0xf]
        %v429 = vld [vmem:[%s3 + $0xbc] sm:$0xf]
        %v430 = vld [vmem:[%s3 + $0xc0] sm:$0xf]
        %v431 = vld [vmem:[%s3 + $0xc4] sm:$0xf]
        %v432 = vld [vmem:[%s3 + $0xc8] sm:$0xf]
        %v433 = vld [vmem:[%s3 + $0xcc] sm:$0xf]
        %v434 = vld [vmem:[%s3 + $0xd0] sm:$0xf]
        %v435 = vld [vmem:[%s3 + $0xd4] sm:$0xf]
        %v436 = vld [vmem:[%s3 + $0xd8] sm:$0xf]
        %v437 = vld [vmem:[%s3 + $0xdc] sm:$0xf]
        %v438 = vld [vmem:[%s3 + $0xe0] sm:$0xf]
        %v439 = vld [vmem:[%s3 + $0xe4] sm:$0xf]
        %v440 = vld [vmem:[%s3 + $0xe8] sm:$0xf]
        %v441 = vld [vmem:[%s3 + $0xec] sm:$0xf]
        %v442 = vld [vmem:[%s3 + $0xf0] sm:$0xf]
        %v443 = vld [vmem:[%s3 + $0xf4] sm:$0xf]
        %v444 = vld [vmem:[%s3 + $0xf8] sm:$0xf]
        %v445 = vld [vmem:[%s3 + $0xfc] sm:$0xf]
        %v446 = vld [vmem:[%s4] sm:$0x1]
        %v447 = vld [vmem:[%s5] sm:$0xf]
        %v448 = vld [vmem:[%s5 + $0x4] sm:$0xf]
        %v449 = vld [vmem:[%s5 + $0x8] sm:$0xf]
        %v450 = vld [vmem:[%s5 + $0xc] sm:$0xf]
        %v451 = vld [vmem:[%s5 + $0x10] sm:$0xf]
        %v452 = vld [vmem:[%s5 + $0x14] sm:$0xf]
        %v453 = vld [vmem:[%s5 + $0x18] sm:$0xf]
        %v454 = vld [vmem:[%s5 + $0x1c] sm:$0xf]
        %v455 = vld [vmem:[%s5 + $0x20] sm:$0xf]
        %v456 = vld [vmem:[%s5 + $0x24] sm:$0xf]
        %v457 = vld [vmem:[%s5 + $0x28] sm:$0xf]
        %v458 = vld [vmem:[%s5 + $0x2c] sm:$0xf]
        %v459 = vld [vmem:[%s5 + $0x30] sm:$0xf]
        %v460 = vld [vmem:[%s5 + $0x34] sm:$0xf]
        %v461 = vld [vmem:[%s5 + $0x38] sm:$0xf]
        %v462 = vld [vmem:[%s5 + $0x3c] sm:$0xf]
        %v463 = vld [vmem:[%s5 + $0x40] sm:$0xf]
        %v464 = vld [vmem:[%s5 + $0x44] sm:$0xf]
        %v465 = vld [vmem:[%s5 + $0x48] sm:$0xf]
        %v466 = vld [vmem:[%s5 + $0x4c] sm:$0xf]
        %v467 = vld [vmem:[%s5 + $0x50] sm:$0xf]
        %v468 = vld [vmem:[%s5 + $0x54] sm:$0xf]
        %v469 = vld [vmem:[%s5 + $0x58] sm:$0xf]
        %v470 = vld [vmem:[%s5 + $0x5c] sm:$0xf]
        %v471 = vld [vmem:[%s5 + $0x60] sm:$0xf]
        %v472 = vld [vmem:[%s5 + $0x64] sm:$0xf]
        %v473 = vld [vmem:[%s5 + $0x68] sm:$0xf]
        %v474 = vld [vmem:[%s5 + $0x6c] sm:$0xf]
        %v475 = vld [vmem:[%s5 + $0x70] sm:$0xf]
        %v476 = vld [vmem:[%s5 + $0x74] sm:$0xf]
        %v477 = vld [vmem:[%s5 + $0x78] sm:$0xf]
        %v478 = vld [vmem:[%s5 + $0x7c] sm:$0xf]
        %v479 = vld [vmem:[%s5 + $0x80] sm:$0xf]
        %v480 = vld [vmem:[%s5 + $0x84] sm:$0xf]
        %v481 = vld [vmem:[%s5 + $0x88] sm:$0xf]
        %v482 = vld [vmem:[%s5 + $0x8c] sm:$0xf]
        %v483 = vld [vmem:[%s5 + $0x90] sm:$0xf]
        %v484 = vld [vmem:[%s5 + $0x94] sm:$0xf]
        %v485 = vld [vmem:[%s5 + $0x98] sm:$0xf]
        %v486 = vld [vmem:[%s5 + $0x9c] sm:$0xf]
        %v487 = vld [vmem:[%s5 + $0xa0] sm:$0xf]
        %v488 = vld [vmem:[%s5 + $0xa4] sm:$0xf]
        %v489 = vld [vmem:[%s5 + $0xa8] sm:$0xf]
        %v490 = vld [vmem:[%s5 + $0xac] sm:$0xf]
        %v491 = vld [vmem:[%s5 + $0xb0] sm:$0xf]
        %v492 = vld [vmem:[%s5 + $0xb4] sm:$0xf]
        %v493 = vld [vmem:[%s5 + $0xb8] sm:$0xf]
        %v494 = vld [vmem:[%s5 + $0xbc] sm:$0xf]
        %v495 = vld [vmem:[%s5 + $0xc0] sm:$0xf]
        %v496 = vld [vmem:[%s5 + $0xc4] sm:$0xf]
        %v497 = vld [vmem:[%s5 + $0xc8] sm:$0xf]
        %v498 = vld [vmem:[%s5 + $0xcc] sm:$0xf]
        %v499 = vld [vmem:[%s5 + $0xd0] sm:$0xf]
        %v500 = vld [vmem:[%s5 + $0xd4] sm:$0xf]
        %v501 = vld [vmem:[%s5 + $0xd8] sm:$0xf]
        %v502 = vld [vmem:[%s5 + $0xdc] sm:$0xf]
        %v503 = vld [vmem:[%s5 + $0xe0] sm:$0xf]
        %v504 = vld [vmem:[%s5 + $0xe4] sm:$0xf]
        %v505 = vld [vmem:[%s5 + $0xe8] sm:$0xf]
        %v506 = vld [vmem:[%s5 + $0xec] sm:$0xf]
        %v507 = vld [vmem:[%s5 + $0xf0] sm:$0xf]
        %v508 = vld [vmem:[%s5 + $0xf4] sm:$0xf]
        %v509 = vld [vmem:[%s5 + $0xf8] sm:$0xf]
        %v510 = vld [vmem:[%s5 + $0xfc] sm:$0xf]
        %v511 = vld [vmem:[%s5 + $0x100] sm:$0xf]
        %v512 = vld [vmem:[%s5 + $0x104] sm:$0xf]
        %v513 = vld [vmem:[%s5 + $0x108] sm:$0xf]
        %v514 = vld [vmem:[%s5 + $0x10c] sm:$0xf]
        %v515 = vld [vmem:[%s5 + $0x110] sm:$0xf]
        %v516 = vld [vmem:[%s5 + $0x114] sm:$0xf]
        %v517 = vld [vmem:[%s5 + $0x118] sm:$0xf]
        %v518 = vld [vmem:[%s5 + $0x11c] sm:$0xf]
        %v519 = vld [vmem:[%s6] sm:$0x1]
        %v520 = vld [vmem:[%s7] sm:$0xf]
        %v521 = vld [vmem:[%s7 + $0x4] sm:$0xf]
        %v522 = vld [vmem:[%s7 + $0x8] sm:$0xf]
        %v523 = vld [vmem:[%s7 + $0xc] sm:$0xf]
        %v524 = vld [vmem:[%s7 + $0x10] sm:$0xf]
        %v525 = vld [vmem:[%s7 + $0x14] sm:$0xf]
        %v526 = vld [vmem:[%s7 + $0x18] sm:$0xf]
        %v527 = vld [vmem:[%s7 + $0x1c] sm:$0xf]
        %v528 = vld [vmem:[%s8] sm:$0x1]
        %v545 = vunpack.c.l.b16 %v331
        %v546 = vunpack.c.l.b16 %v332
        %v547 = vunpack.c.l.b16 %v333
        %v548 = vunpack.c.l.b16 %v334
        %v549 = vunpack.c.l.b16 %v335
        %v550 = vunpack.c.l.b16 %v336
        %v551 = vunpack.c.l.b16 %v337
        %v552 = vunpack.c.l.b16 %v338
        %v553 = vunpack.c.l.b16 %v339
        %v554 = vunpack.c.l.b16 %v340
        %v555 = vunpack.c.l.b16 %v341
        %v556 = vunpack.c.l.b16 %v342
        %v557 = vunpack.c.l.b16 %v343
        %v558 = vunpack.c.l.b16 %v344
        %v559 = vunpack.c.l.b16 %v345
        %v560 = vunpack.c.l.b16 %v346
        %v561 = vpack.c.b16 %v546, %v545
        %v562 = vpack.c.b16 %v548, %v547
        %v563 = vpack.c.b16 %v550, %v549
        %v564 = vpack.c.b16 %v552, %v551
        %v565 = vpack.c.b16 %v554, %v553
        %v566 = vpack.c.b16 %v556, %v555
        %v567 = vpack.c.b16 %v558, %v557
        %v568 = vpack.c.b16 %v560, %v559
        %v570 = vshrl.u32 %v561, 16
        %v572 = vshll.u32 %v561, 16
        %v574 = vrot.slane %v572, 1
        %v575 = vor.u32 %v570, %v574
        %v577 = vshrl.u32 %v562, 16
        %v579 = vshll.u32 %v562, 16
        %v581 = vrot.slane %v579, 1
        %v582 = vor.u32 %v577, %v581
        %v584 = vshrl.u32 %v563, 16
        %v586 = vshll.u32 %v563, 16
        %v588 = vrot.slane %v586, 1
        %v589 = vor.u32 %v584, %v588
        %v591 = vshrl.u32 %v564, 16
        %v593 = vshll.u32 %v564, 16
        %v595 = vrot.slane %v593, 1
        %v596 = vor.u32 %v591, %v595
        %v598 = vshrl.u32 %v565, 16
        %v600 = vshll.u32 %v565, 16
        %v602 = vrot.slane %v600, 1
        %v603 = vor.u32 %v598, %v602
        %v605 = vshrl.u32 %v566, 16
        %v607 = vshll.u32 %v566, 16
        %v609 = vrot.slane %v607, 1
        %v610 = vor.u32 %v605, %v609
        %v612 = vshrl.u32 %v567, 16
        %v614 = vshll.u32 %v567, 16
        %v616 = vrot.slane %v614, 1
        %v617 = vor.u32 %v612, %v616
        %v619 = vshrl.u32 %v568, 16
        %v621 = vshll.u32 %v568, 16
        %v623 = vrot.slane %v621, 1
        %v624 = vor.u32 %v619, %v623
        %625 = vrot.lane.b32.xlu0 %v575, 64
        %v626 = vpop.permute.xlu0 %625
        %627 = vrot.lane.b32.xlu0 %v582, 64
        %v628 = vpop.permute.xlu0 %627
        %629 = vrot.lane.b32.xlu0 %v589, 64
        %v630 = vpop.permute.xlu0 %629
        %631 = vrot.lane.b32.xlu0 %v596, 64
        %v632 = vpop.permute.xlu0 %631
        %633 = vrot.lane.b32.xlu0 %v603, 64
        %v634 = vpop.permute.xlu0 %633
        %635 = vrot.lane.b32.xlu0 %v610, 64
        %v636 = vpop.permute.xlu0 %635
        %637 = vrot.lane.b32.xlu0 %v617, 64
        %v638 = vpop.permute.xlu0 %637
        %639 = vrot.lane.b32.xlu0 %v624, 64
        %v640 = vpop.permute.xlu0 %639
        %v643 = vunpack.c.l.b16 %v347
        %v644 = vunpack.c.l.b16 %v348
        %v645 = vpack.c.b16 %v644, %v643
        %v647 = vshrl.u32 %v645, 16
        %v649 = vshll.u32 %v645, 16
        %v651 = vrot.slane %v649, 1
        %v652 = vor.u32 %v647, %v651
        %653 = vrot.lane.b32.xlu0 %v652, 64
        %v654 = vpop.permute.xlu0 %653
        %vm655 = vcmask 523264
        %v658 = vsel %vm655, %v331, %v626
        %v661 = vsel %vm655, %v333, %v628
        %v664 = vsel %vm655, %v335, %v630
        %v667 = vsel %vm655, %v337, %v632
        %v670 = vsel %vm655, %v339, %v634
        %v673 = vsel %vm655, %v341, %v636
        %v676 = vsel %vm655, %v343, %v638
        %v679 = vsel %vm655, %v345, %v640
        %v682 = vsel %vm655, %v347, %v654
        %v692 = vunpack.c.l.b16 %v658
        %v693 = vunpack.c.l.b16 %v661
        %v694 = vunpack.c.l.b16 %v664
        %v695 = vunpack.c.l.b16 %v667
        %v696 = vunpack.c.l.b16 %v670
        %v697 = vunpack.c.l.b16 %v673
        %v698 = vunpack.c.l.b16 %v676
        %v699 = vunpack.c.l.b16 %v679
        %v700 = vunpack.c.l.b16 %v682
        %v702 = vlaneseq
        %v703 = vshrl.u32 %v702, 7
        %v704 = vsub.s32 0, %v703
        %v705 = vrot.slane %v381, %v704
        %v707 = vpack.c.b16 %v693, %v692
        %v708 = vpack.c.b16 %v694, %v693
        %v709 = vpack.c.b16 %v695, %v694
        %v710 = vpack.c.b16 %v696, %v695
        %v711 = vpack.c.b16 %v697, %v696
        %v712 = vpack.c.b16 %v698, %v697
        %v713 = vpack.c.b16 %v699, %v698
        %v714 = vpack.c.b16 %v700, %v699
        %v755 = vunpack.c.l.b16 %v349
        %v756 = vunpack.c.l.b16 %v350
        %v757 = vunpack.c.l.b16 %v351
        %v758 = vunpack.c.l.b16 %v352
        %v759 = vunpack.c.l.b16 %v353
        %v760 = vunpack.c.l.b16 %v354
        %v761 = vunpack.c.l.b16 %v355
        %v762 = vunpack.c.l.b16 %v356
        %v763 = vunpack.c.l.b16 %v357
        %v764 = vunpack.c.l.b16 %v358
        %v765 = vunpack.c.l.b16 %v359
        %v766 = vunpack.c.l.b16 %v360
        %v767 = vunpack.c.l.b16 %v361
        %v768 = vunpack.c.l.b16 %v362
        %v769 = vunpack.c.l.b16 %v363
        %v770 = vunpack.c.l.b16 %v364
        %v771 = vunpack.c.l.b16 %v365
        %v772 = vunpack.c.l.b16 %v366
        %v773 = vunpack.c.l.b16 %v367
        %v774 = vunpack.c.l.b16 %v368
        %v775 = vunpack.c.l.b16 %v369
        %v776 = vunpack.c.l.b16 %v370
        %v777 = vunpack.c.l.b16 %v371
        %v778 = vunpack.c.l.b16 %v372
        %v779 = vunpack.c.l.b16 %v373
        %v780 = vunpack.c.l.b16 %v374
        %v781 = vunpack.c.l.b16 %v375
        %v782 = vunpack.c.l.b16 %v376
        %v783 = vunpack.c.l.b16 %v377
        %v784 = vunpack.c.l.b16 %v378
        %v785 = vunpack.c.l.b16 %v379
        %v786 = vunpack.c.l.b16 %v380
        %v787 = vpack.c.b16 %v756, %v755
        %v788 = vpack.c.b16 %v758, %v757
        %v789 = vpack.c.b16 %v760, %v759
        %v790 = vpack.c.b16 %v762, %v761
        %v791 = vpack.c.b16 %v764, %v763
        %v792 = vpack.c.b16 %v766, %v765
        %v793 = vpack.c.b16 %v768, %v767
        %v794 = vpack.c.b16 %v770, %v769
        %v795 = vpack.c.b16 %v772, %v771
        %v796 = vpack.c.b16 %v774, %v773
        %v797 = vpack.c.b16 %v776, %v775
        %v798 = vpack.c.b16 %v778, %v777
        %v799 = vpack.c.b16 %v780, %v779
        %v800 = vpack.c.b16 %v782, %v781
        %v801 = vpack.c.b16 %v784, %v783
        %v802 = vpack.c.b16 %v786, %v785
        %819 = vmatprep.subr.bf16.mxu0 0
        %820 = vmatpush1.bf16.msra.mxu0 %v787
        %821 = vmatprep.subr.bf16.mxu0 0
        %822 = vmatpush1.bf16.msra.mxu0 %v788
        %823 = vmatprep.subr.bf16.mxu0 0
        %824 = vmatpush1.bf16.msra.mxu0 %v789
        %825 = vmatprep.subr.bf16.mxu0 0
        %826 = vmatpush1.bf16.msra.mxu0 %v790
        %827 = vmatprep.subr.bf16.mxu0 0
        %828 = vmatpush1.bf16.msra.mxu0 %v791
        %829 = vmatprep.subr.bf16.mxu0 0
        %830 = vmatpush1.bf16.msra.mxu0 %v792
        %831 = vmatprep.subr.bf16.mxu0 0
        %832 = vmatpush1.bf16.msra.mxu0 %v793
        %833 = vmatprep.subr.bf16.mxu0 0
        %834 = vmatpush1.bf16.msra.mxu0 %v794
        %835 = vmatprep.subr.bf16.mxu0 0
        %836 = vmatpush1.bf16.msra.mxu0 %v795
        %837 = vmatprep.subr.bf16.mxu0 0
        %838 = vmatpush1.bf16.msra.mxu0 %v796
        %839 = vmatprep.subr.bf16.mxu0 0
        %840 = vmatpush1.bf16.msra.mxu0 %v797
        %841 = vmatprep.subr.bf16.mxu0 0
        %842 = vmatpush1.bf16.msra.mxu0 %v798
        %843 = vmatprep.subr.bf16.mxu0 0
        %844 = vmatpush1.bf16.msra.mxu0 %v799
        %845 = vmatprep.subr.bf16.mxu0 0
        %846 = vmatpush1.bf16.msra.mxu0 %v800
        %847 = vmatprep.subr.bf16.mxu0 0
        %848 = vmatpush1.bf16.msra.mxu0 %v801
        %849 = vmatprep.subr.bf16.mxu0 0
        %850 = vmatpush1.bf16.msra.mxu0 %v802
        %851 = vmatprep.mubr.bf16.mxu0 %v708
        %852 = vmatmul.mubr.bf16.gmra.mrb[0].mxu0 %v707
        %v853 = vpop.f32.mrb[0].mxu0
        %v854 = vadd.f32 %v705, %v853
        %v855 = vpop.f32.mrb[0].mxu0
        %v856 = vpop.f32.mrb[0].mxu0
        %v857 = vadd.f32 %v705, %v856
        %v858 = vpop.f32.mrb[0].mxu0
        %859 = vmatprep.mubr.bf16.mxu0 %v710
        %860 = vmatmul.mubr.bf16.gmra.mrb[0].mxu0 %v709
        %v861 = vpop.f32.mrb[0].mxu0
        %v862 = vadd.f32 %v705, %v861
        %v863 = vpop.f32.mrb[0].mxu0
        %v864 = vpop.f32.mrb[0].mxu0
        %v865 = vadd.f32 %v705, %v864
        %v866 = vpop.f32.mrb[0].mxu0
        %867 = vmatprep.mubr.bf16.mxu0 %v712
        %868 = vmatmul.mubr.bf16.gmra.mrb[0].mxu0 %v711
        %v869 = vpop.f32.mrb[0].mxu0
        %v870 = vadd.f32 %v705, %v869
        %v871 = vpop.f32.mrb[0].mxu0
        %v872 = vpop.f32.mrb[0].mxu0
        %v873 = vadd.f32 %v705, %v872
        %v874 = vpop.f32.mrb[0].mxu0
        %875 = vmatprep.mubr.bf16.mxu0 %v714
        %876 = vmatmul.mubr.bf16.gmra.mrb[0].mxu0 %v713
        %v877 = vpop.f32.mrb[0].mxu0
        %v878 = vadd.f32 %v705, %v877
        %v879 = vpop.f32.mrb[0].mxu0
        %v880 = vpop.f32.mrb[0].mxu0
        %v881 = vadd.f32 %v705, %v880
        %v882 = vpop.f32.mrb[0].mxu0
        %883 = vdwg.mxu0
        %v884 = vmax.f32 %v854, 0.0
        %v885 = vmax.f32 %v857, 0.0
        %v886 = vmax.f32 %v862, 0.0
        %v887 = vmax.f32 %v865, 0.0
        %v888 = vmax.f32 %v870, 0.0
        %v889 = vmax.f32 %v873, 0.0
        %v890 = vmax.f32 %v878, 0.0
        %v891 = vmax.f32 %v881, 0.0
        %v892 = vpack.c.bf16 %v885, %v884
        %v893 = vpack.c.bf16 %v887, %v886
        %v894 = vpack.c.bf16 %v889, %v888
        %v895 = vpack.c.bf16 %v891, %v890
        %v900 = vunpack.c.l.b16 %v892
        %v901 = vunpack.c.h.b16 %v892
        %v902 = vunpack.c.l.b16 %v893
        %v903 = vunpack.c.h.b16 %v893
        %v904 = vunpack.c.l.b16 %v894
        %v905 = vunpack.c.h.b16 %v894
        %v906 = vunpack.c.l.b16 %v895
        %v907 = vunpack.c.h.b16 %v895
        %v908 = vpack.c.b16 %v900, %v900
        %v909 = vpack.c.b16 %v902, %v902
        %v910 = vpack.c.b16 %v904, %v904
        %v911 = vpack.c.b16 %v906, %v906
        %v913 = vshrl.u32 %v908, 16
        %915 = vrot.lane.b32.xlu0 %v913, 32
        %v916 = vpop.permute.xlu0 %915
        %v917 = vpack.c.b16 %v901, %v901
        %918 = vrot.lane.b32.xlu0 %v917, 64
        %v919 = vpop.permute.xlu0 %918
        %v921 = vshrl.u32 %v917, 16
        %923 = vrot.lane.b32.xlu0 %v921, 96
        %v924 = vpop.permute.xlu0 %923
        %vm925 = vcmask 261120
        %v927 = vsel %vm925, %v908, %v916
        %v929 = vsel %vm655, %v927, %v919
        %vm930 = vcmask 785408
        %v932 = vsel %vm930, %v929, %v924
        %v935 = vshrl.u32 %v909, 16
        %937 = vrot.lane.b32.xlu0 %v935, 32
        %v938 = vpop.permute.xlu0 %937
        %v939 = vpack.c.b16 %v903, %v903
        %940 = vrot.lane.b32.xlu0 %v939, 64
        %v941 = vpop.permute.xlu0 %940
        %v943 = vshrl.u32 %v939, 16
        %945 = vrot.lane.b32.xlu0 %v943, 96
        %v946 = vpop.permute.xlu0 %945
        %v948 = vsel %vm925, %v909, %v938
        %v950 = vsel %vm655, %v948, %v941
        %v952 = vsel %vm930, %v950, %v946
        %v955 = vshrl.u32 %v910, 16
        %957 = vrot.lane.b32.xlu0 %v955, 32
        %v958 = vpop.permute.xlu0 %957
        %v959 = vpack.c.b16 %v905, %v905
        %960 = vrot.lane.b32.xlu0 %v959, 64
        %v961 = vpop.permute.xlu0 %960
        %v963 = vshrl.u32 %v959, 16
        %965 = vrot.lane.b32.xlu0 %v963, 96
        %v966 = vpop.permute.xlu0 %965
        %v968 = vsel %vm925, %v910, %v958
        %v970 = vsel %vm655, %v968, %v961
        %v972 = vsel %vm930, %v970, %v966
        %v975 = vshrl.u32 %v911, 16
        %977 = vrot.lane.b32.xlu0 %v975, 32
        %v978 = vpop.permute.xlu0 %977
        %v979 = vpack.c.b16 %v907, %v907
        %980 = vrot.lane.b32.xlu0 %v979, 64
        %v981 = vpop.permute.xlu0 %980
        %v983 = vshrl.u32 %v979, 16
        %985 = vrot.lane.b32.xlu0 %v983, 96
        %v986 = vpop.permute.xlu0 %985
        %v988 = vsel %vm925, %v911, %v978
        %v990 = vsel %vm655, %v988, %v981
        %v992 = vsel %vm930, %v990, %v986
        %v995 = vrot.slane %v932, 1
        %v998 = vrot.slane %v952, 1
        %v1064 = vunpack.c.l.b16 %v382
        %v1065 = vunpack.c.l.b16 %v383
        %v1066 = vunpack.c.l.b16 %v384
        %v1067 = vunpack.c.l.b16 %v385
        %v1068 = vunpack.c.l.b16 %v386
        %v1069 = vunpack.c.l.b16 %v387
        %v1070 = vunpack.c.l.b16 %v388
        %v1071 = vunpack.c.l.b16 %v389
        %v1072 = vunpack.c.l.b16 %v390
        %v1073 = vunpack.c.l.b16 %v391
        %v1074 = vunpack.c.l.b16 %v392
        %v1075 = vunpack.c.l.b16 %v393
        %v1076 = vunpack.c.l.b16 %v394
        %v1077 = vunpack.c.l.b16 %v395
        %v1078 = vunpack.c.l.b16 %v396
        %v1079 = vunpack.c.l.b16 %v397
        %v1080 = vunpack.c.l.b16 %v398
        %v1081 = vunpack.c.l.b16 %v399
        %v1082 = vunpack.c.l.b16 %v400
        %v1083 = vunpack.c.l.b16 %v401
        %v1084 = vunpack.c.l.b16 %v402
        %v1085 = vunpack.c.l.b16 %v403
        %v1086 = vunpack.c.l.b16 %v404
        %v1087 = vunpack.c.l.b16 %v405
        %v1088 = vunpack.c.l.b16 %v406
        %v1089 = vunpack.c.l.b16 %v407
        %v1090 = vunpack.c.l.b16 %v408
        %v1091 = vunpack.c.l.b16 %v409
        %v1092 = vunpack.c.l.b16 %v410
        %v1093 = vunpack.c.l.b16 %v411
        %v1094 = vunpack.c.l.b16 %v412
        %v1095 = vunpack.c.l.b16 %v413
        %v1096 = vunpack.c.l.b16 %v414
        %v1097 = vunpack.c.l.b16 %v415
        %v1098 = vunpack.c.l.b16 %v416
        %v1099 = vunpack.c.l.b16 %v417
        %v1100 = vunpack.c.l.b16 %v418
        %v1101 = vunpack.c.l.b16 %v419
        %v1102 = vunpack.c.l.b16 %v420
        %v1103 = vunpack.c.l.b16 %v421
        %v1104 = vunpack.c.l.b16 %v422
        %v1105 = vunpack.c.l.b16 %v423
        %v1106 = vunpack.c.l.b16 %v424
        %v1107 = vunpack.c.l.b16 %v425
        %v1108 = vunpack.c.l.b16 %v426
        %v1109 = vunpack.c.l.b16 %v427
        %v1110 = vunpack.c.l.b16 %v428
        %v1111 = vunpack.c.l.b16 %v429
        %v1112 = vunpack.c.l.b16 %v430
        %v1113 = vunpack.c.l.b16 %v431
        %v1114 = vunpack.c.l.b16 %v432
        %v1115 = vunpack.c.l.b16 %v433
        %v1116 = vunpack.c.l.b16 %v434
        %v1117 = vunpack.c.l.b16 %v435
        %v1118 = vunpack.c.l.b16 %v436
        %v1119 = vunpack.c.l.b16 %v437
        %v1120 = vunpack.c.l.b16 %v438
        %v1121 = vunpack.c.l.b16 %v439
        %v1122 = vunpack.c.l.b16 %v440
        %v1123 = vunpack.c.l.b16 %v441
        %v1124 = vunpack.c.l.b16 %v442
        %v1125 = vunpack.c.l.b16 %v443
        %v1126 = vunpack.c.l.b16 %v444
        %v1127 = vunpack.c.l.b16 %v445
        %v1128 = vpack.c.b16 %v1065, %v1064
        %v1129 = vpack.c.b16 %v1067, %v1066
        %v1130 = vpack.c.b16 %v1069, %v1068
        %v1131 = vpack.c.b16 %v1071, %v1070
        %v1132 = vpack.c.b16 %v1073, %v1072
        %v1133 = vpack.c.b16 %v1075, %v1074
        %v1134 = vpack.c.b16 %v1077, %v1076
        %v1135 = vpack.c.b16 %v1079, %v1078
        %v1136 = vpack.c.b16 %v1081, %v1080
        %v1137 = vpack.c.b16 %v1083, %v1082
        %v1138 = vpack.c.b16 %v1085, %v1084
        %v1139 = vpack.c.b16 %v1087, %v1086
        %v1140 = vpack.c.b16 %v1089, %v1088
        %v1141 = vpack.c.b16 %v1091, %v1090
        %v1142 = vpack.c.b16 %v1093, %v1092
        %v1143 = vpack.c.b16 %v1095, %v1094
        %v1144 = vpack.c.b16 %v1097, %v1096
        %v1145 = vpack.c.b16 %v1099, %v1098
        %v1146 = vpack.c.b16 %v1101, %v1100
        %v1147 = vpack.c.b16 %v1103, %v1102
        %v1148 = vpack.c.b16 %v1105, %v1104
        %v1149 = vpack.c.b16 %v1107, %v1106
        %v1150 = vpack.c.b16 %v1109, %v1108
        %v1151 = vpack.c.b16 %v1111, %v1110
        %v1152 = vpack.c.b16 %v1113, %v1112
        %v1153 = vpack.c.b16 %v1115, %v1114
        %v1154 = vpack.c.b16 %v1117, %v1116
        %v1155 = vpack.c.b16 %v1119, %v1118
        %v1156 = vpack.c.b16 %v1121, %v1120
        %v1157 = vpack.c.b16 %v1123, %v1122
        %v1158 = vpack.c.b16 %v1125, %v1124
        %v1159 = vpack.c.b16 %v1127, %v1126
        %1192 = vmatprep.subr.bf16.mxu0 0
        %1193 = vmatpush1.bf16.msra.mxu0 %v1128
        %1194 = vmatprep.subr.bf16.mxu0 0
        %1195 = vmatpush1.bf16.msra.mxu0 %v1129
        %1196 = vmatprep.subr.bf16.mxu0 0
        %1197 = vmatpush1.bf16.msra.mxu0 %v1130
        %1198 = vmatprep.subr.bf16.mxu0 0
        %1199 = vmatpush1.bf16.msra.mxu0 %v1131
        %1200 = vmatprep.subr.bf16.mxu0 0
        %1201 = vmatpush1.bf16.msra.mxu0 %v1132
        %1202 = vmatprep.subr.bf16.mxu0 0
        %1203 = vmatpush1.bf16.msra.mxu0 %v1133
        %1204 = vmatprep.subr.bf16.mxu0 0
        %1205 = vmatpush1.bf16.msra.mxu0 %v1134
        %1206 = vmatprep.subr.bf16.mxu0 0
        %1207 = vmatpush1.bf16.msra.mxu0 %v1135
        %1208 = vmatprep.subr.bf16.mxu0 0
        %1209 = vmatpush1.bf16.msra.mxu0 %v1136
        %1210 = vmatprep.subr.bf16.mxu0 0
        %1211 = vmatpush1.bf16.msra.mxu0 %v1137
        %1212 = vmatprep.subr.bf16.mxu0 0
        %1213 = vmatpush1.bf16.msra.mxu0 %v1138
        %1214 = vmatprep.subr.bf16.mxu0 0
        %1215 = vmatpush1.bf16.msra.mxu0 %v1139
        %1216 = vmatprep.subr.bf16.mxu0 0
        %1217 = vmatpush1.bf16.msra.mxu0 %v1140
        %1218 = vmatprep.subr.bf16.mxu0 0
        %1219 = vmatpush1.bf16.msra.mxu0 %v1141
        %1220 = vmatprep.subr.bf16.mxu0 0
        %1221 = vmatpush1.bf16.msra.mxu0 %v1142
        %1222 = vmatprep.subr.bf16.mxu0 0
        %1223 = vmatpush1.bf16.msra.mxu0 %v1143
        %1224 = vmatprep.mubr.bf16.mxu0 %v995
        %1225 = vmatmul.mubr.bf16.gmra.mrb[0].mxu0 %v932
        %v1226 = vpop.f32.mrb[0].mxu0
        %v1227 = vadd.f32 %v446, %v1226
        %v1228 = vpop.f32.mrb[0].mxu0
        %v1229 = vpop.f32.mrb[0].mxu0
        %v1230 = vpop.f32.mrb[0].mxu0
        %1231 = vdwg.mxu0
        %1232 = vmatprep.subr.bf16.mxu0 0
        %1233 = vmatpush1.bf16.msra.mxu0 %v1144
        %1234 = vmatprep.subr.bf16.mxu0 0
        %1235 = vmatpush1.bf16.msra.mxu0 %v1145
        %1236 = vmatprep.subr.bf16.mxu0 0
        %1237 = vmatpush1.bf16.msra.mxu0 %v1146
        %1238 = vmatprep.subr.bf16.mxu0 0
        %1239 = vmatpush1.bf16.msra.mxu0 %v1147
        %1240 = vmatprep.subr.bf16.mxu0 0
        %1241 = vmatpush1.bf16.msra.mxu0 %v1148
        %1242 = vmatprep.subr.bf16.mxu0 0
        %1243 = vmatpush1.bf16.msra.mxu0 %v1149
        %1244 = vmatprep.subr.bf16.mxu0 0
        %1245 = vmatpush1.bf16.msra.mxu0 %v1150
        %1246 = vmatprep.subr.bf16.mxu0 0
        %1247 = vmatpush1.bf16.msra.mxu0 %v1151
        %1248 = vmatprep.subr.bf16.mxu0 0
        %1249 = vmatpush1.bf16.msra.mxu0 %v1152
        %1250 = vmatprep.subr.bf16.mxu0 0
        %1251 = vmatpush1.bf16.msra.mxu0 %v1153
        %1252 = vmatprep.subr.bf16.mxu0 0
        %1253 = vmatpush1.bf16.msra.mxu0 %v1154
        %1254 = vmatprep.subr.bf16.mxu0 0
        %1255 = vmatpush1.bf16.msra.mxu0 %v1155
        %1256 = vmatprep.subr.bf16.mxu0 0
        %1257 = vmatpush1.bf16.msra.mxu0 %v1156
        %1258 = vmatprep.subr.bf16.mxu0 0
        %1259 = vmatpush1.bf16.msra.mxu0 %v1157
        %1260 = vmatprep.subr.bf16.mxu0 0
        %1261 = vmatpush1.bf16.msra.mxu0 %v1158
        %1262 = vmatprep.subr.bf16.mxu0 0
        %1263 = vmatpush1.bf16.msra.mxu0 %v1159
        %1264 = vmatprep.mubr.bf16.mxu0 %v998
        %1265 = vmatmul.mubr.bf16.gmra.mrb[0].mxu0 %v952
        %v1266 = vpop.f32.mrb[0].mxu0
        %v1267 = vadd.f32 %v1227, %v1266
        %v1268 = vpop.f32.mrb[0].mxu0
        %v1269 = vpop.f32.mrb[0].mxu0
        %v1270 = vpop.f32.mrb[0].mxu0
        %1271 = vdwg.mxu0
        %v1272 = vmax.f32 %v1267, 0.0
        %v1273 = vrot.slane %v995, 1
        %v1274 = vrot.slane %v998, 1
        %1277 = vmatprep.subr.bf16.mxu0 0
        %1278 = vmatpush1.bf16.msra.mxu0 %v1128
        %1279 = vmatprep.subr.bf16.mxu0 0
        %1280 = vmatpush1.bf16.msra.mxu0 %v1129
        %1281 = vmatprep.subr.bf16.mxu0 0
        %1282 = vmatpush1.bf16.msra.mxu0 %v1130
        %1283 = vmatprep.subr.bf16.mxu0 0
        %1284 = vmatpush1.bf16.msra.mxu0 %v1131
        %1285 = vmatprep.subr.bf16.mxu0 0
        %1286 = vmatpush1.bf16.msra.mxu0 %v1132
        %1287 = vmatprep.subr.bf16.mxu0 0
        %1288 = vmatpush1.bf16.msra.mxu0 %v1133
        %1289 = vmatprep.subr.bf16.mxu0 0
        %1290 = vmatpush1.bf16.msra.mxu0 %v1134
        %1291 = vmatprep.subr.bf16.mxu0 0
        %1292 = vmatpush1.bf16.msra.mxu0 %v1135
        %1293 = vmatprep.subr.bf16.mxu0 0
        %1294 = vmatpush1.bf16.msra.mxu0 %v1136
        %1295 = vmatprep.subr.bf16.mxu0 0
        %1296 = vmatpush1.bf16.msra.mxu0 %v1137
        %1297 = vmatprep.subr.bf16.mxu0 0
        %1298 = vmatpush1.bf16.msra.mxu0 %v1138
        %1299 = vmatprep.subr.bf16.mxu0 0
        %1300 = vmatpush1.bf16.msra.mxu0 %v1139
        %1301 = vmatprep.subr.bf16.mxu0 0
        %1302 = vmatpush1.bf16.msra.mxu0 %v1140
        %1303 = vmatprep.subr.bf16.mxu0 0
        %1304 = vmatpush1.bf16.msra.mxu0 %v1141
        %1305 = vmatprep.subr.bf16.mxu0 0
        %1306 = vmatpush1.bf16.msra.mxu0 %v1142
        %1307 = vmatprep.subr.bf16.mxu0 0
        %1308 = vmatpush1.bf16.msra.mxu0 %v1143
        %1309 = vmatprep.mubr.bf16.mxu0 %v1273
        %1310 = vmatmul.mubr.bf16.gmra.mrb[0].mxu0 %v995
        %v1311 = vpop.f32.mrb[0].mxu0
        %v1312 = vadd.f32 %v446, %v1311
        %v1313 = vpop.f32.mrb[0].mxu0
        %v1314 = vpop.f32.mrb[0].mxu0
        %v1315 = vpop.f32.mrb[0].mxu0
        %1316 = vdwg.mxu0
        %1317 = vmatprep.subr.bf16.mxu0 0
        %1318 = vmatpush1.bf16.msra.mxu0 %v1144
        %1319 = vmatprep.subr.bf16.mxu0 0
        %1320 = vmatpush1.bf16.msra.mxu0 %v1145
        %1321 = vmatprep.subr.bf16.mxu0 0
        %1322 = vmatpush1.bf16.msra.mxu0 %v1146
        %1323 = vmatprep.subr.bf16.mxu0 0
        %1324 = vmatpush1.bf16.msra.mxu0 %v1147
        %1325 = vmatprep.subr.bf16.mxu0 0
        %1326 = vmatpush1.bf16.msra.mxu0 %v1148
        %1327 = vmatprep.subr.bf16.mxu0 0
        %1328 = vmatpush1.bf16.msra.mxu0 %v1149
        %1329 = vmatprep.subr.bf16.mxu0 0
        %1330 = vmatpush1.bf16.msra.mxu0 %v1150
        %1331 = vmatprep.subr.bf16.mxu0 0
        %1332 = vmatpush1.bf16.msra.mxu0 %v1151
        %1333 = vmatprep.subr.bf16.mxu0 0
        %1334 = vmatpush1.bf16.msra.mxu0 %v1152
        %1335 = vmatprep.subr.bf16.mxu0 0
        %1336 = vmatpush1.bf16.msra.mxu0 %v1153
        %1337 = vmatprep.subr.bf16.mxu0 0
        %1338 = vmatpush1.bf16.msra.mxu0 %v1154
        %1339 = vmatprep.subr.bf16.mxu0 0
        %1340 = vmatpush1.bf16.msra.mxu0 %v1155
        %1341 = vmatprep.subr.bf16.mxu0 0
        %1342 = vmatpush1.bf16.msra.mxu0 %v1156
        %1343 = vmatprep.subr.bf16.mxu0 0
        %1344 = vmatpush1.bf16.msra.mxu0 %v1157
        %1345 = vmatprep.subr.bf16.mxu0 0
        %1346 = vmatpush1.bf16.msra.mxu0 %v1158
        %1347 = vmatprep.subr.bf16.mxu0 0
        %1348 = vmatpush1.bf16.msra.mxu0 %v1159
        %1349 = vmatprep.mubr.bf16.mxu0 %v1274
        %1350 = vmatmul.mubr.bf16.gmra.mrb[0].mxu0 %v998
        %v1351 = vpop.f32.mrb[0].mxu0
        %v1352 = vadd.f32 %v1312, %v1351
        %v1353 = vpop.f32.mrb[0].mxu0
        %v1354 = vpop.f32.mrb[0].mxu0
        %v1355 = vpop.f32.mrb[0].mxu0
        %1356 = vdwg.mxu0
        %v1357 = vmax.f32 %v1352, 0.0
        %v1358 = vrot.slane %v932, 2
        %v1359 = vrot.slane %v995, 2
        %v1360 = vrot.slane %v952, 2
        %v1361 = vrot.slane %v998, 2
        %1366 = vmatprep.subr.bf16.mxu0 0
        %1367 = vmatpush1.bf16.msra.mxu0 %v1128
        %1368 = vmatprep.subr.bf16.mxu0 0
        %1369 = vmatpush1.bf16.msra.mxu0 %v1129
        %1370 = vmatprep.subr.bf16.mxu0 0
        %1371 = vmatpush1.bf16.msra.mxu0 %v1130
        %1372 = vmatprep.subr.bf16.mxu0 0
        %1373 = vmatpush1.bf16.msra.mxu0 %v1131
        %1374 = vmatprep.subr.bf16.mxu0 0
        %1375 = vmatpush1.bf16.msra.mxu0 %v1132
        %1376 = vmatprep.subr.bf16.mxu0 0
        %1377 = vmatpush1.bf16.msra.mxu0 %v1133
        %1378 = vmatprep.subr.bf16.mxu0 0
        %1379 = vmatpush1.bf16.msra.mxu0 %v1134
        %1380 = vmatprep.subr.bf16.mxu0 0
        %1381 = vmatpush1.bf16.msra.mxu0 %v1135
        %1382 = vmatprep.subr.bf16.mxu0 0
        %1383 = vmatpush1.bf16.msra.mxu0 %v1136
        %1384 = vmatprep.subr.bf16.mxu0 0
        %1385 = vmatpush1.bf16.msra.mxu0 %v1137
        %1386 = vmatprep.subr.bf16.mxu0 0
        %1387 = vmatpush1.bf16.msra.mxu0 %v1138
        %1388 = vmatprep.subr.bf16.mxu0 0
        %1389 = vmatpush1.bf16.msra.mxu0 %v1139
        %1390 = vmatprep.subr.bf16.mxu0 0
        %1391 = vmatpush1.bf16.msra.mxu0 %v1140
        %1392 = vmatprep.subr.bf16.mxu0 0
        %1393 = vmatpush1.bf16.msra.mxu0 %v1141
        %1394 = vmatprep.subr.bf16.mxu0 0
        %1395 = vmatpush1.bf16.msra.mxu0 %v1142
        %1396 = vmatprep.subr.bf16.mxu0 0
        %1397 = vmatpush1.bf16.msra.mxu0 %v1143
        %1398 = vmatprep.mubr.bf16.mxu0 %v1359
        %1399 = vmatmul.mubr.bf16.gmra.mrb[0].mxu0 %v1358
        %v1400 = vpop.f32.mrb[0].mxu0
        %v1401 = vadd.f32 %v446, %v1400
        %v1402 = vpop.f32.mrb[0].mxu0
        %v1403 = vpop.f32.mrb[0].mxu0
        %v1404 = vpop.f32.mrb[0].mxu0
        %1405 = vdwg.mxu0
        %1406 = vmatprep.subr.bf16.mxu0 0
        %1407 = vmatpush1.bf16.msra.mxu0 %v1144
        %1408 = vmatprep.subr.bf16.mxu0 0
        %1409 = vmatpush1.bf16.msra.mxu0 %v1145
        %1410 = vmatprep.subr.bf16.mxu0 0
        %1411 = vmatpush1.bf16.msra.mxu0 %v1146
        %1412 = vmatprep.subr.bf16.mxu0 0
        %1413 = vmatpush1.bf16.msra.mxu0 %v1147
        %1414 = vmatprep.subr.bf16.mxu0 0
        %1415 = vmatpush1.bf16.msra.mxu0 %v1148
        %1416 = vmatprep.subr.bf16.mxu0 0
        %1417 = vmatpush1.bf16.msra.mxu0 %v1149
        %1418 = vmatprep.subr.bf16.mxu0 0
        %1419 = vmatpush1.bf16.msra.mxu0 %v1150
        %1420 = vmatprep.subr.bf16.mxu0 0
        %1421 = vmatpush1.bf16.msra.mxu0 %v1151
        %1422 = vmatprep.subr.bf16.mxu0 0
        %1423 = vmatpush1.bf16.msra.mxu0 %v1152
        %1424 = vmatprep.subr.bf16.mxu0 0
        %1425 = vmatpush1.bf16.msra.mxu0 %v1153
        %1426 = vmatprep.subr.bf16.mxu0 0
        %1427 = vmatpush1.bf16.msra.mxu0 %v1154
        %1428 = vmatprep.subr.bf16.mxu0 0
        %1429 = vmatpush1.bf16.msra.mxu0 %v1155
        %1430 = vmatprep.subr.bf16.mxu0 0
        %1431 = vmatpush1.bf16.msra.mxu0 %v1156
        %1432 = vmatprep.subr.bf16.mxu0 0
        %1433 = vmatpush1.bf16.msra.mxu0 %v1157
        %1434 = vmatprep.subr.bf16.mxu0 0
        %1435 = vmatpush1.bf16.msra.mxu0 %v1158
        %1436 = vmatprep.subr.bf16.mxu0 0
        %1437 = vmatpush1.bf16.msra.mxu0 %v1159
        %1438 = vmatprep.mubr.bf16.mxu0 %v1361
        %1439 = vmatmul.mubr.bf16.gmra.mrb[0].mxu0 %v1360
        %v1440 = vpop.f32.mrb[0].mxu0
        %v1441 = vadd.f32 %v1401, %v1440
        %v1442 = vpop.f32.mrb[0].mxu0
        %v1443 = vpop.f32.mrb[0].mxu0
        %v1444 = vpop.f32.mrb[0].mxu0
        %1445 = vdwg.mxu0
        %v1446 = vmax.f32 %v1441, 0.0
        %v1448 = vrot.slane %v972, 1
        %1450 = vmatprep.subr.bf16.mxu0 0
        %1451 = vmatpush1.bf16.msra.mxu0 %v1128
        %1452 = vmatprep.subr.bf16.mxu0 0
        %1453 = vmatpush1.bf16.msra.mxu0 %v1129
        %1454 = vmatprep.subr.bf16.mxu0 0
        %1455 = vmatpush1.bf16.msra.mxu0 %v1130
        %1456 = vmatprep.subr.bf16.mxu0 0
        %1457 = vmatpush1.bf16.msra.mxu0 %v1131
        %1458 = vmatprep.subr.bf16.mxu0 0
        %1459 = vmatpush1.bf16.msra.mxu0 %v1132
        %1460 = vmatprep.subr.bf16.mxu0 0
        %1461 = vmatpush1.bf16.msra.mxu0 %v1133
        %1462 = vmatprep.subr.bf16.mxu0 0
        %1463 = vmatpush1.bf16.msra.mxu0 %v1134
        %1464 = vmatprep.subr.bf16.mxu0 0
        %1465 = vmatpush1.bf16.msra.mxu0 %v1135
        %1466 = vmatprep.subr.bf16.mxu0 0
        %1467 = vmatpush1.bf16.msra.mxu0 %v1136
        %1468 = vmatprep.subr.bf16.mxu0 0
        %1469 = vmatpush1.bf16.msra.mxu0 %v1137
        %1470 = vmatprep.subr.bf16.mxu0 0
        %1471 = vmatpush1.bf16.msra.mxu0 %v1138
        %1472 = vmatprep.subr.bf16.mxu0 0
        %1473 = vmatpush1.bf16.msra.mxu0 %v1139
        %1474 = vmatprep.subr.bf16.mxu0 0
        %1475 = vmatpush1.bf16.msra.mxu0 %v1140
        %1476 = vmatprep.subr.bf16.mxu0 0
        %1477 = vmatpush1.bf16.msra.mxu0 %v1141
        %1478 = vmatprep.subr.bf16.mxu0 0
        %1479 = vmatpush1.bf16.msra.mxu0 %v1142
        %1480 = vmatprep.subr.bf16.mxu0 0
        %1481 = vmatpush1.bf16.msra.mxu0 %v1143
        %1482 = vmatprep.mubr.bf16.mxu0 %v998
        %1483 = vmatmul.mubr.bf16.gmra.mrb[0].mxu0 %v952
        %v1484 = vpop.f32.mrb[0].mxu0
        %v1485 = vadd.f32 %v446, %v1484
        %v1486 = vpop.f32.mrb[0].mxu0
        %v1487 = vpop.f32.mrb[0].mxu0
        %v1488 = vpop.f32.mrb[0].mxu0
        %1489 = vdwg.mxu0
        %1490 = vmatprep.subr.bf16.mxu0 0
        %1491 = vmatpush1.bf16.msra.mxu0 %v1144
        %1492 = vmatprep.subr.bf16.mxu0 0
        %1493 = vmatpush1.bf16.msra.mxu0 %v1145
        %1494 = vmatprep.subr.bf16.mxu0 0
        %1495 = vmatpush1.bf16.msra.mxu0 %v1146
        %1496 = vmatprep.subr.bf16.mxu0 0
        %1497 = vmatpush1.bf16.msra.mxu0 %v1147
        %1498 = vmatprep.subr.bf16.mxu0 0
        %1499 = vmatpush1.bf16.msra.mxu0 %v1148
        %1500 = vmatprep.subr.bf16.mxu0 0
        %1501 = vmatpush1.bf16.msra.mxu0 %v1149
        %1502 = vmatprep.subr.bf16.mxu0 0
        %1503 = vmatpush1.bf16.msra.mxu0 %v1150
        %1504 = vmatprep.subr.bf16.mxu0 0
        %1505 = vmatpush1.bf16.msra.mxu0 %v1151
        %1506 = vmatprep.subr.bf16.mxu0 0
        %1507 = vmatpush1.bf16.msra.mxu0 %v1152
        %1508 = vmatprep.subr.bf16.mxu0 0
        %1509 = vmatpush1.bf16.msra.mxu0 %v1153
        %1510 = vmatprep.subr.bf16.mxu0 0
        %1511 = vmatpush1.bf16.msra.mxu0 %v1154
        %1512 = vmatprep.subr.bf16.mxu0 0
        %1513 = vmatpush1.bf16.msra.mxu0 %v1155
        %1514 = vmatprep.subr.bf16.mxu0 0
        %1515 = vmatpush1.bf16.msra.mxu0 %v1156
        %1516 = vmatprep.subr.bf16.mxu0 0
        %1517 = vmatpush1.bf16.msra.mxu0 %v1157
        %1518 = vmatprep.subr.bf16.mxu0 0
        %1519 = vmatpush1.bf16.msra.mxu0 %v1158
        %1520 = vmatprep.subr.bf16.mxu0 0
        %1521 = vmatpush1.bf16.msra.mxu0 %v1159
        %1522 = vmatprep.mubr.bf16.mxu0 %v1448
        %1523 = vmatmul.mubr.bf16.gmra.mrb[0].mxu0 %v972
        %v1524 = vpop.f32.mrb[0].mxu0
        %v1525 = vadd.f32 %v1485, %v1524
        %v1526 = vpop.f32.mrb[0].mxu0
        %v1527 = vpop.f32.mrb[0].mxu0
        %v1528 = vpop.f32.mrb[0].mxu0
        %1529 = vdwg.mxu0
        %v1530 = vmax.f32 %v1525, 0.0
        %v1531 = vrot.slane %v1448, 1
        %1533 = vmatprep.subr.bf16.mxu0 0
        %1534 = vmatpush1.bf16.msra.mxu0 %v1128
        %1535 = vmatprep.subr.bf16.mxu0 0
        %1536 = vmatpush1.bf16.msra.mxu0 %v1129
        %1537 = vmatprep.subr.bf16.mxu0 0
        %1538 = vmatpush1.bf16.msra.mxu0 %v1130
        %1539 = vmatprep.subr.bf16.mxu0 0
        %1540 = vmatpush1.bf16.msra.mxu0 %v1131
        %1541 = vmatprep.subr.bf16.mxu0 0
        %1542 = vmatpush1.bf16.msra.mxu0 %v1132
        %1543 = vmatprep.subr.bf16.mxu0 0
        %1544 = vmatpush1.bf16.msra.mxu0 %v1133
        %1545 = vmatprep.subr.bf16.mxu0 0
        %1546 = vmatpush1.bf16.msra.mxu0 %v1134
        %1547 = vmatprep.subr.bf16.mxu0 0
        %1548 = vmatpush1.bf16.msra.mxu0 %v1135
        %1549 = vmatprep.subr.bf16.mxu0 0
        %1550 = vmatpush1.bf16.msra.mxu0 %v1136
        %1551 = vmatprep.subr.bf16.mxu0 0
        %1552 = vmatpush1.bf16.msra.mxu0 %v1137
        %1553 = vmatprep.subr.bf16.mxu0 0
        %1554 = vmatpush1.bf16.msra.mxu0 %v1138
        %1555 = vmatprep.subr.bf16.mxu0 0
        %1556 = vmatpush1.bf16.msra.mxu0 %v1139
        %1557 = vmatprep.subr.bf16.mxu0 0
        %1558 = vmatpush1.bf16.msra.mxu0 %v1140
        %1559 = vmatprep.subr.bf16.mxu0 0
        %1560 = vmatpush1.bf16.msra.mxu0 %v1141
        %1561 = vmatprep.subr.bf16.mxu0 0
        %1562 = vmatpush1.bf16.msra.mxu0 %v1142
        %1563 = vmatprep.subr.bf16.mxu0 0
        %1564 = vmatpush1.bf16.msra.mxu0 %v1143
        %1565 = vmatprep.mubr.bf16.mxu0 %v1274
        %1566 = vmatmul.mubr.bf16.gmra.mrb[0].mxu0 %v998
        %v1567 = vpop.f32.mrb[0].mxu0
        %v1568 = vadd.f32 %v446, %v1567
        %v1569 = vpop.f32.mrb[0].mxu0
        %v1570 = vpop.f32.mrb[0].mxu0
        %v1571 = vpop.f32.mrb[0].mxu0
        %1572 = vdwg.mxu0
        %1573 = vmatprep.subr.bf16.mxu0 0
        %1574 = vmatpush1.bf16.msra.mxu0 %v1144
        %1575 = vmatprep.subr.bf16.mxu0 0
        %1576 = vmatpush1.bf16.msra.mxu0 %v1145
        %1577 = vmatprep.subr.bf16.mxu0 0
        %1578 = vmatpush1.bf16.msra.mxu0 %v1146
        %1579 = vmatprep.subr.bf16.mxu0 0
        %1580 = vmatpush1.bf16.msra.mxu0 %v1147
        %1581 = vmatprep.subr.bf16.mxu0 0
        %1582 = vmatpush1.bf16.msra.mxu0 %v1148
        %1583 = vmatprep.subr.bf16.mxu0 0
        %1584 = vmatpush1.bf16.msra.mxu0 %v1149
        %1585 = vmatprep.subr.bf16.mxu0 0
        %1586 = vmatpush1.bf16.msra.mxu0 %v1150
        %1587 = vmatprep.subr.bf16.mxu0 0
        %1588 = vmatpush1.bf16.msra.mxu0 %v1151
        %1589 = vmatprep.subr.bf16.mxu0 0
        %1590 = vmatpush1.bf16.msra.mxu0 %v1152
        %1591 = vmatprep.subr.bf16.mxu0 0
        %1592 = vmatpush1.bf16.msra.mxu0 %v1153
        %1593 = vmatprep.subr.bf16.mxu0 0
        %1594 = vmatpush1.bf16.msra.mxu0 %v1154
        %1595 = vmatprep.subr.bf16.mxu0 0
        %1596 = vmatpush1.bf16.msra.mxu0 %v1155
        %1597 = vmatprep.subr.bf16.mxu0 0
        %1598 = vmatpush1.bf16.msra.mxu0 %v1156
        %1599 = vmatprep.subr.bf16.mxu0 0
        %1600 = vmatpush1.bf16.msra.mxu0 %v1157
        %1601 = vmatprep.subr.bf16.mxu0 0
        %1602 = vmatpush1.bf16.msra.mxu0 %v1158
        %1603 = vmatprep.subr.bf16.mxu0 0
        %1604 = vmatpush1.bf16.msra.mxu0 %v1159
        %1605 = vmatprep.mubr.bf16.mxu0 %v1531
        %1606 = vmatmul.mubr.bf16.gmra.mrb[0].mxu0 %v1448
        %v1607 = vpop.f32.mrb[0].mxu0
        %v1608 = vadd.f32 %v1568, %v1607
        %v1609 = vpop.f32.mrb[0].mxu0
        %v1610 = vpop.f32.mrb[0].mxu0
        %v1611 = vpop.f32.mrb[0].mxu0
        %1612 = vdwg.mxu0
        %v1613 = vmax.f32 %v1608, 0.0
        %v1614 = vrot.slane %v972, 2
        %v1615 = vrot.slane %v1448, 2
        %1618 = vmatprep.subr.bf16.mxu0 0
        %1619 = vmatpush1.bf16.msra.mxu0 %v1128
        %1620 = vmatprep.subr.bf16.mxu0 0
        %1621 = vmatpush1.bf16.msra.mxu0 %v1129
        %1622 = vmatprep.subr.bf16.mxu0 0
        %1623 = vmatpush1.bf16.msra.mxu0 %v1130
        %1624 = vmatprep.subr.bf16.mxu0 0
        %1625 = vmatpush1.bf16.msra.mxu0 %v1131
        %1626 = vmatprep.subr.bf16.mxu0 0
        %1627 = vmatpush1.bf16.msra.mxu0 %v1132
        %1628 = vmatprep.subr.bf16.mxu0 0
        %1629 = vmatpush1.bf16.msra.mxu0 %v1133
        %1630 = vmatprep.subr.bf16.mxu0 0
        %1631 = vmatpush1.bf16.msra.mxu0 %v1134
        %1632 = vmatprep.subr.bf16.mxu0 0
        %1633 = vmatpush1.bf16.msra.mxu0 %v1135
        %1634 = vmatprep.subr.bf16.mxu0 0
        %1635 = vmatpush1.bf16.msra.mxu0 %v1136
        %1636 = vmatprep.subr.bf16.mxu0 0
        %1637 = vmatpush1.bf16.msra.mxu0 %v1137
        %1638 = vmatprep.subr.bf16.mxu0 0
        %1639 = vmatpush1.bf16.msra.mxu0 %v1138
        %1640 = vmatprep.subr.bf16.mxu0 0
        %1641 = vmatpush1.bf16.msra.mxu0 %v1139
        %1642 = vmatprep.subr.bf16.mxu0 0
        %1643 = vmatpush1.bf16.msra.mxu0 %v1140
        %1644 = vmatprep.subr.bf16.mxu0 0
        %1645 = vmatpush1.bf16.msra.mxu0 %v1141
        %1646 = vmatprep.subr.bf16.mxu0 0
        %1647 = vmatpush1.bf16.msra.mxu0 %v1142
        %1648 = vmatprep.subr.bf16.mxu0 0
        %1649 = vmatpush1.bf16.msra.mxu0 %v1143
        %1650 = vmatprep.mubr.bf16.mxu0 %v1361
        %1651 = vmatmul.mubr.bf16.gmra.mrb[0].mxu0 %v1360
        %v1652 = vpop.f32.mrb[0].mxu0
        %v1653 = vadd.f32 %v446, %v1652
        %v1654 = vpop.f32.mrb[0].mxu0
        %v1655 = vpop.f32.mrb[0].mxu0
        %v1656 = vpop.f32.mrb[0].mxu0
        %1657 = vdwg.mxu0
        %1658 = vmatprep.subr.bf16.mxu0 0
        %1659 = vmatpush1.bf16.msra.mxu0 %v1144
        %1660 = vmatprep.subr.bf16.mxu0 0
        %1661 = vmatpush1.bf16.msra.mxu0 %v1145
        %1662 = vmatprep.subr.bf16.mxu0 0
        %1663 = vmatpush1.bf16.msra.mxu0 %v1146
        %1664 = vmatprep.subr.bf16.mxu0 0
        %1665 = vmatpush1.bf16.msra.mxu0 %v1147
        %1666 = vmatprep.subr.bf16.mxu0 0
        %1667 = vmatpush1.bf16.msra.mxu0 %v1148
        %1668 = vmatprep.subr.bf16.mxu0 0
        %1669 = vmatpush1.bf16.msra.mxu0 %v1149
        %1670 = vmatprep.subr.bf16.mxu0 0
        %1671 = vmatpush1.bf16.msra.mxu0 %v1150
        %1672 = vmatprep.subr.bf16.mxu0 0
        %1673 = vmatpush1.bf16.msra.mxu0 %v1151
        %1674 = vmatprep.subr.bf16.mxu0 0
        %1675 = vmatpush1.bf16.msra.mxu0 %v1152
        %1676 = vmatprep.subr.bf16.mxu0 0
        %1677 = vmatpush1.bf16.msra.mxu0 %v1153
        %1678 = vmatprep.subr.bf16.mxu0 0
        %1679 = vmatpush1.bf16.msra.mxu0 %v1154
        %1680 = vmatprep.subr.bf16.mxu0 0
        %1681 = vmatpush1.bf16.msra.mxu0 %v1155
        %1682 = vmatprep.subr.bf16.mxu0 0
        %1683 = vmatpush1.bf16.msra.mxu0 %v1156
        %1684 = vmatprep.subr.bf16.mxu0 0
        %1685 = vmatpush1.bf16.msra.mxu0 %v1157
        %1686 = vmatprep.subr.bf16.mxu0 0
        %1687 = vmatpush1.bf16.msra.mxu0 %v1158
        %1688 = vmatprep.subr.bf16.mxu0 0
        %1689 = vmatpush1.bf16.msra.mxu0 %v1159
        %1690 = vmatprep.mubr.bf16.mxu0 %v1615
        %1691 = vmatmul.mubr.bf16.gmra.mrb[0].mxu0 %v1614
        %v1692 = vpop.f32.mrb[0].mxu0
        %v1693 = vadd.f32 %v1653, %v1692
        %v1694 = vpop.f32.mrb[0].mxu0
        %v1695 = vpop.f32.mrb[0].mxu0
        %v1696 = vpop.f32.mrb[0].mxu0
        %1697 = vdwg.mxu0
        %v1698 = vmax.f32 %v1693, 0.0
        %v1700 = vrot.slane %v992, 1
        %1702 = vmatprep.subr.bf16.mxu0 0
        %1703 = vmatpush1.bf16.msra.mxu0 %v1128
        %1704 = vmatprep.subr.bf16.mxu0 0
        %1705 = vmatpush1.bf16.msra.mxu0 %v1129
        %1706 = vmatprep.subr.bf16.mxu0 0
        %1707 = vmatpush1.bf16.msra.mxu0 %v1130
        %1708 = vmatprep.subr.bf16.mxu0 0
        %1709 = vmatpush1.bf16.msra.mxu0 %v1131
        %1710 = vmatprep.subr.bf16.mxu0 0
        %1711 = vmatpush1.bf16.msra.mxu0 %v1132
        %1712 = vmatprep.subr.bf16.mxu0 0
        %1713 = vmatpush1.bf16.msra.mxu0 %v1133
        %1714 = vmatprep.subr.bf16.mxu0 0
        %1715 = vmatpush1.bf16.msra.mxu0 %v1134
        %1716 = vmatprep.subr.bf16.mxu0 0
        %1717 = vmatpush1.bf16.msra.mxu0 %v1135
        %1718 = vmatprep.subr.bf16.mxu0 0
        %1719 = vmatpush1.bf16.msra.mxu0 %v1136
        %1720 = vmatprep.subr.bf16.mxu0 0
        %1721 = vmatpush1.bf16.msra.mxu0 %v1137
        %1722 = vmatprep.subr.bf16.mxu0 0
        %1723 = vmatpush1.bf16.msra.mxu0 %v1138
        %1724 = vmatprep.subr.bf16.mxu0 0
        %1725 = vmatpush1.bf16.msra.mxu0 %v1139
        %1726 = vmatprep.subr.bf16.mxu0 0
        %1727 = vmatpush1.bf16.msra.mxu0 %v1140
        %1728 = vmatprep.subr.bf16.mxu0 0
        %1729 = vmatpush1.bf16.msra.mxu0 %v1141
        %1730 = vmatprep.subr.bf16.mxu0 0
        %1731 = vmatpush1.bf16.msra.mxu0 %v1142
        %1732 = vmatprep.subr.bf16.mxu0 0
        %1733 = vmatpush1.bf16.msra.mxu0 %v1143
        %1734 = vmatprep.mubr.bf16.mxu0 %v1448
        %1735 = vmatmul.mubr.bf16.gmra.mrb[0].mxu0 %v972
        %v1736 = vpop.f32.mrb[0].mxu0
        %v1737 = vadd.f32 %v446, %v1736
        %v1738 = vpop.f32.mrb[0].mxu0
        %v1739 = vpop.f32.mrb[0].mxu0
        %v1740 = vpop.f32.mrb[0].mxu0
        %1741 = vdwg.mxu0
        %1742 = vmatprep.subr.bf16.mxu0 0
        %1743 = vmatpush1.bf16.msra.mxu0 %v1144
        %1744 = vmatprep.subr.bf16.mxu0 0
        %1745 = vmatpush1.bf16.msra.mxu0 %v1145
        %1746 = vmatprep.subr.bf16.mxu0 0
        %1747 = vmatpush1.bf16.msra.mxu0 %v1146
        %1748 = vmatprep.subr.bf16.mxu0 0
        %1749 = vmatpush1.bf16.msra.mxu0 %v1147
        %1750 = vmatprep.subr.bf16.mxu0 0
        %1751 = vmatpush1.bf16.msra.mxu0 %v1148
        %1752 = vmatprep.subr.bf16.mxu0 0
        %1753 = vmatpush1.bf16.msra.mxu0 %v1149
        %1754 = vmatprep.subr.bf16.mxu0 0
        %1755 = vmatpush1.bf16.msra.mxu0 %v1150
        %1756 = vmatprep.subr.bf16.mxu0 0
        %1757 = vmatpush1.bf16.msra.mxu0 %v1151
        %1758 = vmatprep.subr.bf16.mxu0 0
        %1759 = vmatpush1.bf16.msra.mxu0 %v1152
        %1760 = vmatprep.subr.bf16.mxu0 0
        %1761 = vmatpush1.bf16.msra.mxu0 %v1153
        %1762 = vmatprep.subr.bf16.mxu0 0
        %1763 = vmatpush1.bf16.msra.mxu0 %v1154
        %1764 = vmatprep.subr.bf16.mxu0 0
        %1765 = vmatpush1.bf16.msra.mxu0 %v1155
        %1766 = vmatprep.subr.bf16.mxu0 0
        %1767 = vmatpush1.bf16.msra.mxu0 %v1156
        %1768 = vmatprep.subr.bf16.mxu0 0
        %1769 = vmatpush1.bf16.msra.mxu0 %v1157
        %1770 = vmatprep.subr.bf16.mxu0 0
        %1771 = vmatpush1.bf16.msra.mxu0 %v1158
        %1772 = vmatprep.subr.bf16.mxu0 0
        %1773 = vmatpush1.bf16.msra.mxu0 %v1159
        %1774 = vmatprep.mubr.bf16.mxu0 %v1700
        %1775 = vmatmul.mubr.bf16.gmra.mrb[0].mxu0 %v992
        %v1776 = vpop.f32.mrb[0].mxu0
        %v1777 = vadd.f32 %v1737, %v1776
        %v1778 = vpop.f32.mrb[0].mxu0
        %v1779 = vpop.f32.mrb[0].mxu0
        %v1780 = vpop.f32.mrb[0].mxu0
        %1781 = vdwg.mxu0
        %v1782 = vmax.f32 %v1777, 0.0
        %v1783 = vrot.slane %v1700, 1
        %1785 = vmatprep.subr.bf16.mxu0 0
        %1786 = vmatpush1.bf16.msra.mxu0 %v1128
        %1787 = vmatprep.subr.bf16.mxu0 0
        %1788 = vmatpush1.bf16.msra.mxu0 %v1129
        %1789 = vmatprep.subr.bf16.mxu0 0
        %1790 = vmatpush1.bf16.msra.mxu0 %v1130
        %1791 = vmatprep.subr.bf16.mxu0 0
        %1792 = vmatpush1.bf16.msra.mxu0 %v1131
        %1793 = vmatprep.subr.bf16.mxu0 0
        %1794 = vmatpush1.bf16.msra.mxu0 %v1132
        %1795 = vmatprep.subr.bf16.mxu0 0
        %1796 = vmatpush1.bf16.msra.mxu0 %v1133
        %1797 = vmatprep.subr.bf16.mxu0 0
        %1798 = vmatpush1.bf16.msra.mxu0 %v1134
        %1799 = vmatprep.subr.bf16.mxu0 0
        %1800 = vmatpush1.bf16.msra.mxu0 %v1135
        %1801 = vmatprep.subr.bf16.mxu0 0
        %1802 = vmatpush1.bf16.msra.mxu0 %v1136
        %1803 = vmatprep.subr.bf16.mxu0 0
        %1804 = vmatpush1.bf16.msra.mxu0 %v1137
        %1805 = vmatprep.subr.bf16.mxu0 0
        %1806 = vmatpush1.bf16.msra.mxu0 %v1138
        %1807 = vmatprep.subr.bf16.mxu0 0
        %1808 = vmatpush1.bf16.msra.mxu0 %v1139
        %1809 = vmatprep.subr.bf16.mxu0 0
        %1810 = vmatpush1.bf16.msra.mxu0 %v1140
        %1811 = vmatprep.subr.bf16.mxu0 0
        %1812 = vmatpush1.bf16.msra.mxu0 %v1141
        %1813 = vmatprep.subr.bf16.mxu0 0
        %1814 = vmatpush1.bf16.msra.mxu0 %v1142
        %1815 = vmatprep.subr.bf16.mxu0 0
        %1816 = vmatpush1.bf16.msra.mxu0 %v1143
        %1817 = vmatprep.mubr.bf16.mxu0 %v1531
        %1818 = vmatmul.mubr.bf16.gmra.mrb[0].mxu0 %v1448
        %v1819 = vpop.f32.mrb[0].mxu0
        %v1820 = vadd.f32 %v446, %v1819
        %v1821 = vpop.f32.mrb[0].mxu0
        %v1822 = vpop.f32.mrb[0].mxu0
        %v1823 = vpop.f32.mrb[0].mxu0
        %1824 = vdwg.mxu0
        %1825 = vmatprep.subr.bf16.mxu0 0
        %1826 = vmatpush1.bf16.msra.mxu0 %v1144
        %1827 = vmatprep.subr.bf16.mxu0 0
        %1828 = vmatpush1.bf16.msra.mxu0 %v1145
        %1829 = vmatprep.subr.bf16.mxu0 0
        %1830 = vmatpush1.bf16.msra.mxu0 %v1146
        %1831 = vmatprep.subr.bf16.mxu0 0
        %1832 = vmatpush1.bf16.msra.mxu0 %v1147
        %1833 = vmatprep.subr.bf16.mxu0 0
        %1834 = vmatpush1.bf16.msra.mxu0 %v1148
        %1835 = vmatprep.subr.bf16.mxu0 0
        %1836 = vmatpush1.bf16.msra.mxu0 %v1149
        %1837 = vmatprep.subr.bf16.mxu0 0
        %1838 = vmatpush1.bf16.msra.mxu0 %v1150
        %1839 = vmatprep.subr.bf16.mxu0 0
        %1840 = vmatpush1.bf16.msra.mxu0 %v1151
        %1841 = vmatprep.subr.bf16.mxu0 0
        %1842 = vmatpush1.bf16.msra.mxu0 %v1152
        %1843 = vmatprep.subr.bf16.mxu0 0
        %1844 = vmatpush1.bf16.msra.mxu0 %v1153
        %1845 = vmatprep.subr.bf16.mxu0 0
        %1846 = vmatpush1.bf16.msra.mxu0 %v1154
        %1847 = vmatprep.subr.bf16.mxu0 0
        %1848 = vmatpush1.bf16.msra.mxu0 %v1155
        %1849 = vmatprep.subr.bf16.mxu0 0
        %1850 = vmatpush1.bf16.msra.mxu0 %v1156
        %1851 = vmatprep.subr.bf16.mxu0 0
        %1852 = vmatpush1.bf16.msra.mxu0 %v1157
        %1853 = vmatprep.subr.bf16.mxu0 0
        %1854 = vmatpush1.bf16.msra.mxu0 %v1158
        %1855 = vmatprep.subr.bf16.mxu0 0
        %1856 = vmatpush1.bf16.msra.mxu0 %v1159
        %1857 = vmatprep.mubr.bf16.mxu0 %v1783
        %1858 = vmatmul.mubr.bf16.gmra.mrb[0].mxu0 %v1700
        %v1859 = vpop.f32.mrb[0].mxu0
        %v1860 = vadd.f32 %v1820, %v1859
        %v1861 = vpop.f32.mrb[0].mxu0
        %v1862 = vpop.f32.mrb[0].mxu0
        %v1863 = vpop.f32.mrb[0].mxu0
        %1864 = vdwg.mxu0
        %v1865 = vmax.f32 %v1860, 0.0
        %v1866 = vrot.slane %v992, 2
        %v1867 = vrot.slane %v1700, 2
        %1870 = vmatprep.subr.bf16.mxu0 0
        %1871 = vmatpush1.bf16.msra.mxu0 %v1128
        %1872 = vmatprep.subr.bf16.mxu0 0
        %1873 = vmatpush1.bf16.msra.mxu0 %v1129
        %1874 = vmatprep.subr.bf16.mxu0 0
        %1875 = vmatpush1.bf16.msra.mxu0 %v1130
        %1876 = vmatprep.subr.bf16.mxu0 0
        %1877 = vmatpush1.bf16.msra.mxu0 %v1131
        %1878 = vmatprep.subr.bf16.mxu0 0
        %1879 = vmatpush1.bf16.msra.mxu0 %v1132
        %1880 = vmatprep.subr.bf16.mxu0 0
        %1881 = vmatpush1.bf16.msra.mxu0 %v1133
        %1882 = vmatprep.subr.bf16.mxu0 0
        %1883 = vmatpush1.bf16.msra.mxu0 %v1134
        %1884 = vmatprep.subr.bf16.mxu0 0
        %1885 = vmatpush1.bf16.msra.mxu0 %v1135
        %1886 = vmatprep.subr.bf16.mxu0 0
        %1887 = vmatpush1.bf16.msra.mxu0 %v1136
        %1888 = vmatprep.subr.bf16.mxu0 0
        %1889 = vmatpush1.bf16.msra.mxu0 %v1137
        %1890 = vmatprep.subr.bf16.mxu0 0
        %1891 = vmatpush1.bf16.msra.mxu0 %v1138
        %1892 = vmatprep.subr.bf16.mxu0 0
        %1893 = vmatpush1.bf16.msra.mxu0 %v1139
        %1894 = vmatprep.subr.bf16.mxu0 0
        %1895 = vmatpush1.bf16.msra.mxu0 %v1140
        %1896 = vmatprep.subr.bf16.mxu0 0
        %1897 = vmatpush1.bf16.msra.mxu0 %v1141
        %1898 = vmatprep.subr.bf16.mxu0 0
        %1899 = vmatpush1.bf16.msra.mxu0 %v1142
        %1900 = vmatprep.subr.bf16.mxu0 0
        %1901 = vmatpush1.bf16.msra.mxu0 %v1143
        %1902 = vmatprep.mubr.bf16.mxu0 %v1615
        %1903 = vmatmul.mubr.bf16.gmra.mrb[0].mxu0 %v1614
        %v1904 = vpop.f32.mrb[0].mxu0
        %v1905 = vadd.f32 %v446, %v1904
        %v1906 = vpop.f32.mrb[0].mxu0
        %v1907 = vpop.f32.mrb[0].mxu0
        %v1908 = vpop.f32.mrb[0].mxu0
        %1909 = vdwg.mxu0
        %1910 = vmatprep.subr.bf16.mxu0 0
        %1911 = vmatpush1.bf16.msra.mxu0 %v1144
        %1912 = vmatprep.subr.bf16.mxu0 0
        %1913 = vmatpush1.bf16.msra.mxu0 %v1145
        %1914 = vmatprep.subr.bf16.mxu0 0
        %1915 = vmatpush1.bf16.msra.mxu0 %v1146
        %1916 = vmatprep.subr.bf16.mxu0 0
        %1917 = vmatpush1.bf16.msra.mxu0 %v1147
        %1918 = vmatprep.subr.bf16.mxu0 0
        %1919 = vmatpush1.bf16.msra.mxu0 %v1148
        %1920 = vmatprep.subr.bf16.mxu0 0
        %1921 = vmatpush1.bf16.msra.mxu0 %v1149
        %1922 = vmatprep.subr.bf16.mxu0 0
        %1923 = vmatpush1.bf16.msra.mxu0 %v1150
        %1924 = vmatprep.subr.bf16.mxu0 0
        %1925 = vmatpush1.bf16.msra.mxu0 %v1151
        %1926 = vmatprep.subr.bf16.mxu0 0
        %1927 = vmatpush1.bf16.msra.mxu0 %v1152
        %1928 = vmatprep.subr.bf16.mxu0 0
        %1929 = vmatpush1.bf16.msra.mxu0 %v1153
        %1930 = vmatprep.subr.bf16.mxu0 0
        %1931 = vmatpush1.bf16.msra.mxu0 %v1154
        %1932 = vmatprep.subr.bf16.mxu0 0
        %1933 = vmatpush1.bf16.msra.mxu0 %v1155
        %1934 = vmatprep.subr.bf16.mxu0 0
        %1935 = vmatpush1.bf16.msra.mxu0 %v1156
        %1936 = vmatprep.subr.bf16.mxu0 0
        %1937 = vmatpush1.bf16.msra.mxu0 %v1157
        %1938 = vmatprep.subr.bf16.mxu0 0
        %1939 = vmatpush1.bf16.msra.mxu0 %v1158
        %1940 = vmatprep.subr.bf16.mxu0 0
        %1941 = vmatpush1.bf16.msra.mxu0 %v1159
        %1942 = vmatprep.mubr.bf16.mxu0 %v1867
        %1943 = vmatmul.mubr.bf16.gmra.mrb[0].mxu0 %v1866
        %v1944 = vpop.f32.mrb[0].mxu0
        %v1945 = vadd.f32 %v1905, %v1944
        %v1946 = vpop.f32.mrb[0].mxu0
        %v1947 = vpop.f32.mrb[0].mxu0
        %v1948 = vpop.f32.mrb[0].mxu0
        %1949 = vdwg.mxu0
        %v1950 = vmax.f32 %v1945, 0.0
        %1952 = vrot.lane.b32.xlu0 %v1357, 64
        %v1953 = vpop.permute.xlu0 %1952
        %1956 = vrot.lane.b32.xlu0 %v1530, 64
        %v1957 = vpop.permute.xlu0 %1956
        %1960 = vrot.lane.b32.xlu0 %v1698, 64
        %v1961 = vpop.permute.xlu0 %1960
        %1964 = vrot.lane.b32.xlu0 %v1865, 64
        %v1965 = vpop.permute.xlu0 %1964
        %v1967 = vsel %vm655, %v1272, %v1953
        %v1968 = vsel %vm655, %v1446, %v1957
        %v1969 = vsel %vm655, %v1613, %v1961
        %v1970 = vsel %vm655, %v1782, %v1965
        %v1971 = vpack.c.bf16 %v1967, %v1967
        %v1972 = vpack.c.bf16 %v1968, %v1968
        %v1973 = vpack.c.bf16 %v1969, %v1969
        %v1974 = vpack.c.bf16 %v1970, %v1970
        %v1975 = vpack.c.bf16 %v1950, %v1950
        %v2048 = vunpack.c.l.b16 %v447
        %v2049 = vunpack.c.l.b16 %v448
        %v2050 = vunpack.c.l.b16 %v449
        %v2051 = vunpack.c.l.b16 %v450
        %v2052 = vunpack.c.l.b16 %v451
        %v2053 = vunpack.c.l.b16 %v452
        %v2054 = vunpack.c.l.b16 %v453
        %v2055 = vunpack.c.l.b16 %v454
        %v2056 = vunpack.c.l.b16 %v455
        %v2057 = vunpack.c.l.b16 %v456
        %v2058 = vunpack.c.l.b16 %v457
        %v2059 = vunpack.c.l.b16 %v458
        %v2060 = vunpack.c.l.b16 %v459
        %v2061 = vunpack.c.l.b16 %v460
        %v2062 = vunpack.c.l.b16 %v461
        %v2063 = vunpack.c.l.b16 %v462
        %v2064 = vunpack.c.l.b16 %v463
        %v2065 = vunpack.c.l.b16 %v464
        %v2066 = vunpack.c.l.b16 %v465
        %v2067 = vunpack.c.l.b16 %v466
        %v2068 = vunpack.c.l.b16 %v467
        %v2069 = vunpack.c.l.b16 %v468
        %v2070 = vunpack.c.l.b16 %v469
        %v2071 = vunpack.c.l.b16 %v470
        %v2072 = vunpack.c.l.b16 %v471
        %v2073 = vunpack.c.l.b16 %v472
        %v2074 = vunpack.c.l.b16 %v473
        %v2075 = vunpack.c.l.b16 %v474
        %v2076 = vunpack.c.l.b16 %v475
        %v2077 = vunpack.c.l.b16 %v476
        %v2078 = vunpack.c.l.b16 %v477
        %v2079 = vunpack.c.l.b16 %v478
        %v2080 = vunpack.c.l.b16 %v479
        %v2081 = vunpack.c.l.b16 %v480
        %v2082 = vunpack.c.l.b16 %v481
        %v2083 = vunpack.c.l.b16 %v482
        %v2084 = vunpack.c.l.b16 %v483
        %v2085 = vunpack.c.l.b16 %v484
        %v2086 = vunpack.c.l.b16 %v485
        %v2087 = vunpack.c.l.b16 %v486
        %v2088 = vunpack.c.l.b16 %v487
        %v2089 = vunpack.c.l.b16 %v488
        %v2090 = vunpack.c.l.b16 %v489
        %v2091 = vunpack.c.l.b16 %v490
        %v2092 = vunpack.c.l.b16 %v491
        %v2093 = vunpack.c.l.b16 %v492
        %v2094 = vunpack.c.l.b16 %v493
        %v2095 = vunpack.c.l.b16 %v494
        %v2096 = vunpack.c.l.b16 %v495
        %v2097 = vunpack.c.l.b16 %v496
        %v2098 = vunpack.c.l.b16 %v497
        %v2099 = vunpack.c.l.b16 %v498
        %v2100 = vunpack.c.l.b16 %v499
        %v2101 = vunpack.c.l.b16 %v500
        %v2102 = vunpack.c.l.b16 %v501
        %v2103 = vunpack.c.l.b16 %v502
        %v2104 = vunpack.c.l.b16 %v503
        %v2105 = vunpack.c.l.b16 %v504
        %v2106 = vunpack.c.l.b16 %v505
        %v2107 = vunpack.c.l.b16 %v506
        %v2108 = vunpack.c.l.b16 %v507
        %v2109 = vunpack.c.l.b16 %v508
        %v2110 = vunpack.c.l.b16 %v509
        %v2111 = vunpack.c.l.b16 %v510
        %v2112 = vunpack.c.l.b16 %v511
        %v2113 = vunpack.c.l.b16 %v512
        %v2114 = vunpack.c.l.b16 %v513
        %v2115 = vunpack.c.l.b16 %v514
        %v2116 = vunpack.c.l.b16 %v515
        %v2117 = vunpack.c.l.b16 %v516
        %v2118 = vunpack.c.l.b16 %v517
        %v2119 = vunpack.c.l.b16 %v518
        %v2120 = vpack.c.b16 %v2049, %v2048
        %v2121 = vpack.c.b16 %v2051, %v2050
        %v2122 = vpack.c.b16 %v2053, %v2052
        %v2123 = vpack.c.b16 %v2055, %v2054
        %v2124 = vpack.c.b16 %v2057, %v2056
        %v2125 = vpack.c.b16 %v2059, %v2058
        %v2126 = vpack.c.b16 %v2061, %v2060
        %v2127 = vpack.c.b16 %v2063, %v2062
        %v2128 = vpack.c.b16 %v2065, %v2064
        %v2129 = vpack.c.b16 %v2067, %v2066
        %v2130 = vpack.c.b16 %v2069, %v2068
        %v2131 = vpack.c.b16 %v2071, %v2070
        %v2132 = vpack.c.b16 %v2073, %v2072
        %v2133 = vpack.c.b16 %v2075, %v2074
        %v2134 = vpack.c.b16 %v2077, %v2076
        %v2135 = vpack.c.b16 %v2079, %v2078
        %v2136 = vpack.c.b16 %v2081, %v2080
        %v2137 = vpack.c.b16 %v2083, %v2082
        %v2138 = vpack.c.b16 %v2085, %v2084
        %v2139 = vpack.c.b16 %v2087, %v2086
        %v2140 = vpack.c.b16 %v2089, %v2088
        %v2141 = vpack.c.b16 %v2091, %v2090
        %v2142 = vpack.c.b16 %v2093, %v2092
        %v2143 = vpack.c.b16 %v2095, %v2094
        %v2144 = vpack.c.b16 %v2097, %v2096
        %v2145 = vpack.c.b16 %v2099, %v2098
        %v2146 = vpack.c.b16 %v2101, %v2100
        %v2147 = vpack.c.b16 %v2103, %v2102
        %v2148 = vpack.c.b16 %v2105, %v2104
        %v2149 = vpack.c.b16 %v2107, %v2106
        %v2150 = vpack.c.b16 %v2109, %v2108
        %v2151 = vpack.c.b16 %v2111, %v2110
        %v2152 = vpack.c.b16 %v2113, %v2112
        %v2153 = vpack.c.b16 %v2115, %v2114
        %v2154 = vpack.c.b16 %v2117, %v2116
        %v2155 = vpack.c.b16 %v2119, %v2118
        %v2193 = vsel %vm655, %v1975, 0
        %2195 = vmatprep.subr.bf16.mxu0 0
        %2196 = vmatpush1.bf16.msra.mxu0 %v2120
        %2197 = vmatprep.subr.bf16.mxu0 0
        %2198 = vmatpush1.bf16.msra.mxu0 %v2121
        %2199 = vmatprep.subr.bf16.mxu0 0
        %2200 = vmatpush1.bf16.msra.mxu0 %v2122
        %2201 = vmatprep.subr.bf16.mxu0 0
        %2202 = vmatpush1.bf16.msra.mxu0 %v2123
        %2203 = vmatprep.subr.bf16.mxu0 0
        %2204 = vmatpush1.bf16.msra.mxu0 %v2124
        %2205 = vmatprep.subr.bf16.mxu0 0
        %2206 = vmatpush1.bf16.msra.mxu0 %v2125
        %2207 = vmatprep.subr.bf16.mxu0 0
        %2208 = vmatpush1.bf16.msra.mxu0 %v2126
        %2209 = vmatprep.subr.bf16.mxu0 0
        %2210 = vmatpush1.bf16.msra.mxu0 %v2127
        %2211 = vmatprep.subr.bf16.mxu0 0
        %2212 = vmatpush1.bf16.msra.mxu0 %v2128
        %2213 = vmatprep.subr.bf16.mxu0 0
        %2214 = vmatpush1.bf16.msra.mxu0 %v2129
        %2215 = vmatprep.subr.bf16.mxu0 0
        %2216 = vmatpush1.bf16.msra.mxu0 %v2130
        %2217 = vmatprep.subr.bf16.mxu0 0
        %2218 = vmatpush1.bf16.msra.mxu0 %v2131
        %2219 = vmatprep.subr.bf16.mxu0 0
        %2220 = vmatpush1.bf16.msra.mxu0 %v2132
        %2221 = vmatprep.subr.bf16.mxu0 0
        %2222 = vmatpush1.bf16.msra.mxu0 %v2133
        %2223 = vmatprep.subr.bf16.mxu0 0
        %2224 = vmatpush1.bf16.msra.mxu0 %v2134
        %2225 = vmatprep.subr.bf16.mxu0 0
        %2226 = vmatpush1.bf16.msra.mxu0 %v2135
        %2227 = vmatprep.mubr.bf16.mxu0 %v1972
        %2228 = vmatmul.mubr.bf16.gmra.mrb[0].mxu0 %v1971
        %v2229 = vpop.f32.mrb[0].mxu0
        %v2230 = vadd.f32 %v519, %v2229
        %v2231 = vpop.f32.mrb[0].mxu0
        %v2232 = vpop.f32.mrb[0].mxu0
        %v2233 = vpop.f32.mrb[0].mxu0
        %2234 = vdwg.mxu0
        %2235 = vmatprep.subr.bf16.mxu0 0
        %2236 = vmatpush1.bf16.msra.mxu0 %v2136
        %2237 = vmatprep.subr.bf16.mxu0 0
        %2238 = vmatpush1.bf16.msra.mxu0 %v2137
        %2239 = vmatprep.subr.bf16.mxu0 0
        %2240 = vmatpush1.bf16.msra.mxu0 %v2138
        %2241 = vmatprep.subr.bf16.mxu0 0
        %2242 = vmatpush1.bf16.msra.mxu0 %v2139
        %2243 = vmatprep.subr.bf16.mxu0 0
        %2244 = vmatpush1.bf16.msra.mxu0 %v2140
        %2245 = vmatprep.subr.bf16.mxu0 0
        %2246 = vmatpush1.bf16.msra.mxu0 %v2141
        %2247 = vmatprep.subr.bf16.mxu0 0
        %2248 = vmatpush1.bf16.msra.mxu0 %v2142
        %2249 = vmatprep.subr.bf16.mxu0 0
        %2250 = vmatpush1.bf16.msra.mxu0 %v2143
        %2251 = vmatprep.subr.bf16.mxu0 0
        %2252 = vmatpush1.bf16.msra.mxu0 %v2144
        %2253 = vmatprep.subr.bf16.mxu0 0
        %2254 = vmatpush1.bf16.msra.mxu0 %v2145
        %2255 = vmatprep.subr.bf16.mxu0 0
        %2256 = vmatpush1.bf16.msra.mxu0 %v2146
        %2257 = vmatprep.subr.bf16.mxu0 0
        %2258 = vmatpush1.bf16.msra.mxu0 %v2147
        %2259 = vmatprep.subr.bf16.mxu0 0
        %2260 = vmatpush1.bf16.msra.mxu0 %v2148
        %2261 = vmatprep.subr.bf16.mxu0 0
        %2262 = vmatpush1.bf16.msra.mxu0 %v2149
        %2263 = vmatprep.subr.bf16.mxu0 0
        %2264 = vmatpush1.bf16.msra.mxu0 %v2150
        %2265 = vmatprep.subr.bf16.mxu0 0
        %2266 = vmatpush1.bf16.msra.mxu0 %v2151
        %2267 = vmatprep.mubr.bf16.mxu0 %v1974
        %2268 = vmatmul.mubr.bf16.gmra.mrb[0].mxu0 %v1973
        %v2269 = vpop.f32.mrb[0].mxu0
        %v2270 = vadd.f32 %v2230, %v2269
        %v2271 = vpop.f32.mrb[0].mxu0
        %v2272 = vpop.f32.mrb[0].mxu0
        %v2273 = vpop.f32.mrb[0].mxu0
        %2274 = vdwg.mxu0
        %2275 = vmatprep.subr.bf16.mxu0 0
        %2276 = vmatpush1.bf16.msra.mxu0 %v2152
        %2277 = vmatprep.subr.bf16.mxu0 0
        %2278 = vmatpush1.bf16.msra.mxu0 %v2153
        %2279 = vmatprep.subr.bf16.mxu0 0
        %2280 = vmatpush1.bf16.msra.mxu0 %v2154
        %2281 = vmatprep.subr.bf16.mxu0 0
        %2282 = vmatpush1.bf16.msra.mxu0 %v2155
        %2283 = vmatprep.subr.bf16.mxu0 0
        %2284 = vmatpush1.bf16.msra.mxu0 0
        %2285 = vmatprep.subr.bf16.mxu0 0
        %2286 = vmatpush1.bf16.msra.mxu0 0
        %2287 = vmatprep.subr.bf16.mxu0 0
        %2288 = vmatpush1.bf16.msra.mxu0 0
        %2289 = vmatprep.subr.bf16.mxu0 0
        %2290 = vmatpush1.bf16.msra.mxu0 0
        %2291 = vmatprep.subr.bf16.mxu0 0
        %2292 = vmatpush1.bf16.msra.mxu0 0
        %2293 = vmatprep.subr.bf16.mxu0 0
        %2294 = vmatpush1.bf16.msra.mxu0 0
        %2295 = vmatprep.subr.bf16.mxu0 0
        %2296 = vmatpush1.bf16.msra.mxu0 0
        %2297 = vmatprep.subr.bf16.mxu0 0
        %2298 = vmatpush1.bf16.msra.mxu0 0
        %2299 = vmatprep.subr.bf16.mxu0 0
        %2300 = vmatpush1.bf16.msra.mxu0 0
        %2301 = vmatprep.subr.bf16.mxu0 0
        %2302 = vmatpush1.bf16.msra.mxu0 0
        %2303 = vmatprep.subr.bf16.mxu0 0
        %2304 = vmatpush1.bf16.msra.mxu0 0
        %2305 = vmatprep.subr.bf16.mxu0 0
        %2306 = vmatpush1.bf16.msra.mxu0 0
        %2307 = vmatprep.mubr.bf16.mxu0 0
        %2308 = vmatmul.mubr.bf16.gmra.mrb[0].mxu0 %v2193
        %v2309 = vpop.f32.mrb[0].mxu0
        %v2310 = vadd.f32 %v2270, %v2309
        %v2311 = vpop.f32.mrb[0].mxu0
        %v2312 = vpop.f32.mrb[0].mxu0
        %v2313 = vpop.f32.mrb[0].mxu0
        %2314 = vdwg.mxu0
        %v2315 = vmax.f32 %v2310, 0.0
        %v2316 = vpack.c.bf16 %v2315, %v2315
        %v2325 = vunpack.c.l.b16 %v520
        %v2326 = vunpack.c.l.b16 %v521
        %v2327 = vunpack.c.l.b16 %v522
        %v2328 = vunpack.c.l.b16 %v523
        %v2329 = vunpack.c.l.b16 %v524
        %v2330 = vunpack.c.l.b16 %v525
        %v2331 = vunpack.c.l.b16 %v526
        %v2332 = vunpack.c.l.b16 %v527
        %v2333 = vpack.c.b16 %v2326, %v2325
        %v2334 = vpack.c.b16 %v2328, %v2327
        %v2335 = vpack.c.b16 %v2330, %v2329
        %v2336 = vpack.c.b16 %v2332, %v2331
        %v2342 = vsel %vm655, %v2316, 0
        %2344 = vmatprep.subr.bf16.mxu0 0
        %2345 = vmatpush1.bf16.msra.mxu0 %v2333
        %2346 = vmatprep.subr.bf16.mxu0 0
        %2347 = vmatpush1.bf16.msra.mxu0 %v2334
        %2348 = vmatprep.subr.bf16.mxu0 0
        %2349 = vmatpush1.bf16.msra.mxu0 %v2335
        %2350 = vmatprep.subr.bf16.mxu0 0
        %2351 = vmatpush1.bf16.msra.mxu0 %v2336
        %2352 = vmatprep.subr.bf16.mxu0 0
        %2353 = vmatpush1.bf16.msra.mxu0 0
        %2354 = vmatprep.subr.bf16.mxu0 0
        %2355 = vmatpush1.bf16.msra.mxu0 0
        %2356 = vmatprep.subr.bf16.mxu0 0
        %2357 = vmatpush1.bf16.msra.mxu0 0
        %2358 = vmatprep.subr.bf16.mxu0 0
        %2359 = vmatpush1.bf16.msra.mxu0 0
        %2360 = vmatprep.subr.bf16.mxu0 0
        %2361 = vmatpush1.bf16.msra.mxu0 0
        %2362 = vmatprep.subr.bf16.mxu0 0
        %2363 = vmatpush1.bf16.msra.mxu0 0
        %2364 = vmatprep.subr.bf16.mxu0 0
        %2365 = vmatpush1.bf16.msra.mxu0 0
        %2366 = vmatprep.subr.bf16.mxu0 0
        %2367 = vmatpush1.bf16.msra.mxu0 0
        %2368 = vmatprep.subr.bf16.mxu0 0
        %2369 = vmatpush1.bf16.msra.mxu0 0
        %2370 = vmatprep.subr.bf16.mxu0 0
        %2371 = vmatpush1.bf16.msra.mxu0 0
        %2372 = vmatprep.subr.bf16.mxu0 0
        %2373 = vmatpush1.bf16.msra.mxu0 0
        %2374 = vmatprep.subr.bf16.mxu0 0
        %2375 = vmatpush1.bf16.msra.mxu0 0
        %2376 = vmatprep.mubr.bf16.mxu0 0
        %2377 = vmatmul.mubr.bf16.gmra.mrb[0].mxu0 %v2342
        %v2378 = vpop.f32.mrb[0].mxu0
        %v2379 = vadd.f32 %v528, %v2378
        %v2380 = vpop.f32.mrb[0].mxu0
        %v2381 = vpop.f32.mrb[0].mxu0
        %v2382 = vpop.f32.mrb[0].mxu0
        %2383 = vdwg.mxu0
        %v2384 = vmax.f32 %v2379, 0.0
        %2385 = vst [vmem:[%s324] sm:$0x1] %v2384
        %s2386 = sand.u32 %s225, 1
        %s2387 = scalar_lea.sflag [#allocation3], %s2386
        %s2388 = sand.u32 %s225, 1
        %s2389 = scalar_lea.vmem [#allocation2], %s2388
        // Predicated region
        $region57: #{encoder_forward.1} parent=55 // pred_check
          %p2390 = pneg %p235
        $region58: #{encoder_forward.1} parent=55 // pred_check_branch
          %2392 = sbr.rel (%p2390) target = $region60
        $region59: #{encoder_forward.1} parent=55 // pred_region
          %s2394 = ssub.s32 16, 16
          %2395 = vsyncadd %s2387, %s2394
          %s2396 = smul.addr %s23, 16
          %s2397 = scalar_lea.hbm %s9, %s2396
          %s2399 = sshll.u32 %s2389, 4
          %s2400 = int_to_ptr.vmem [resolvable:$true] %s2399
          %2402 = dma.vmem_to_hbm [thread:$0]  %s2400, 16, %s2397, %s2387
        $region60: #{encoder_forward.1} parent=55 // pred_fallthru
          _
      $region56: #{encoder_forward.1} parent=5 // pred_fallthru
        _
      %p2403 = scmp.le.s32.totalorder 2, %s18
      // Predicated region
      $region61: #{encoder_forward.1} parent=5 // pred_check
        %p2404 = pneg %p2403
      $region62: #{encoder_forward.1} parent=5 // pred_check_branch
        %2406 = sbr.rel (%p2404) target = $region64
      $region63: #{encoder_forward.1} parent=5 // pred_region
        %s2407 = ssub.s32 %s18, 2
        // Predicated region
        $region65: #{encoder_forward.1} parent=63 // pred_check
          %p2408 = pneg %p241
        $region66: #{encoder_forward.1} parent=63 // pred_check_branch
          %2410 = sbr.rel (%p2408) target = $region68
        $region67: #{encoder_forward.1} parent=63 // pred_region
          %s2411 = sand.u32 %s226, 1
          %s2412 = scalar_lea.sflag [#allocation3], %s2411
          %s2413 = sand.u32 %s226, 1
          %s2414 = scalar_lea.vmem [#allocation2], %s2413
          %2415 = dma.done %s2412, 16
        $region68: #{encoder_forward.1} parent=63 // pred_fallthru
          _
      $region64: #{encoder_forward.1} parent=5 // pred_fallthru
        _
    $region6: #{encoder_forward.1} parent=1 // loop_footer
      %s22 = sadd.s32 1, %s18
    $region7: #{encoder_forward.1} parent=1 // loop_footer_branch
      %17 = sbr.rel target = $region3
    $region8: #{encoder_forward.1} parent=1 // loop_exit
      _
    %2416 = vsyncpa [#allocation3], 1
    %s2417 = scalar_lea.sflag [#allocation3], 1
    %2418 = vsyncpa %s2417, 1

</llo_original>
